<compile_context>
chip_gen: v7x
topology: tpu7x:2x2x1
jax: 0.10.0
libtpu: 0.0.40
codegen_flags: <defaults>
</compile_context>

<pallas_src>
import functools
import math

import jax
import jax.numpy as jnp
from jax import lax
from jax.experimental import pallas as pl
from jax.experimental.pallas import tpu as pltpu

_MASK_VALUE = -1e30  # large finite negative instead of -inf (flash-safe)


# ---------------------------------------------------------------------------
# Tile-size helpers (block last-two dims must be 8/128-aligned or full dims)
# ---------------------------------------------------------------------------
def _tile(dim, cap, align):
    """Largest tile <= cap that divides `dim` and is a multiple of `align`;
    falls back to the full dim (a full-dim block is always layout-legal)."""
    if dim <= cap:
        return dim
    t = (cap // align) * align
    while t >= align:
        if dim % t == 0:
            return t
        t -= align
    return dim


def _seq_tile(seq_len, cap=256):
    """Largest multiple of 8 that divides seq_len and is <= cap."""
    t = min((cap // 8) * 8, (seq_len // 8) * 8)
    while t >= 8:
        if seq_len % t == 0:
            return t
        t -= 8
    return seq_len


# ---------------------------------------------------------------------------
# Tiled linear kernels (torch weight layout, NT dot_general, f32 accumulator)
# ---------------------------------------------------------------------------
def _linear_kernel(x_ref, w_ref, b_ref, o_ref, acc_ref):
    # x: (tm, tk), w: (tn, tk) [torch (out, in) layout], b: (1, tn), o: (tm, tn)
    k = pl.program_id(2)

    @pl.when(k == 0)
    def _init():
        acc_ref[...] = jnp.zeros_like(acc_ref)

    acc_ref[...] += lax.dot_general(
        x_ref[...], w_ref[...],
        dimension_numbers=(((1,), (1,)), ((), ())),   # contract K, no transpose op
        preferred_element_type=jnp.float32)

    @pl.when(k == pl.num_programs(2) - 1)
    def _store():
        o_ref[...] = (acc_ref[...] + b_ref[...]).astype(o_ref.dtype)


def linear_pallas(x2d, w, b, *, tm_cap=256, tn_cap=512, tk_cap=512):
    """x2d (M, K) @ w.T + b with w in torch (N, K) layout."""
    M, K = x2d.shape
    N = w.shape[0]
    tm = _tile(M, tm_cap, 8)
    tk = _tile(K, tk_cap, 128)
    tn = _tile(N, tn_cap, 128)
    grid = (M // tm, N // tn, K // tk)
    return pl.pallas_call(
        _linear_kernel,
        out_shape=jax.ShapeDtypeStruct((M, N), jnp.float32),
        grid=grid,
        in_specs=[
            pl.BlockSpec((tm, tk), lambda i, j, k: (i, k)),
            pl.BlockSpec((tn, tk), lambda i, j, k: (j, k)),
            pl.BlockSpec((1, tn), lambda i, j, k: (0, j)),
        ],
        out_specs=pl.BlockSpec((tm, tn), lambda i, j, k: (i, j)),
        scratch_shapes=[pltpu.VMEM((tm, tn), jnp.float32)],
        compiler_params=pltpu.CompilerParams(
            dimension_semantics=("parallel", "parallel", "arbitrary")),
    )(x2d, w, b.reshape(1, N))


def _qkv_proj_kernel(x_ref, w_ref, b_ref, o_ref, acc_ref):
    # x: (tm, tk); w: (1, tn, tk) [torch layout]; b: (1, 1, tn); o: (1, tm, tn)
    k = pl.program_id(3)

    @pl.when(k == 0)
    def _init():
        acc_ref[...] = jnp.zeros_like(acc_ref)

    acc_ref[...] += lax.dot_general(
        x_ref[...], w_ref[0],
        dimension_numbers=(((1,), (1,)), ((), ())),
        preferred_element_type=jnp.float32)

    @pl.when(k == pl.num_programs(3) - 1)
    def _store():
        o_ref[0] = (acc_ref[...] + b_ref[0]).astype(o_ref.dtype)


def qkv_proj_pallas(x2d, w_qkv, b_qkv, d_out, *, tm_cap=256, tn_cap=512, tk_cap=512):
    """Combined QKV projection. Output is written directly in (3, M, d_out)
    layout via the output index_map (q/k/v split is free, no XLA transpose)."""
    M, K = x2d.shape
    assert w_qkv.shape == (3 * d_out, K)
    w3 = w_qkv.reshape(3, d_out, K)      # free reshape (leading-dim split)
    b3 = b_qkv.reshape(3, 1, d_out)      # free reshape
    tm = _tile(M, tm_cap, 8)
    tk = _tile(K, tk_cap, 128)
    tn = _tile(d_out, tn_cap, 128)
    grid = (3, M // tm, d_out // tn, K // tk)
    return pl.pallas_call(
        _qkv_proj_kernel,
        out_shape=jax.ShapeDtypeStruct((3, M, d_out), jnp.float32),
        grid=grid,
        in_specs=[
            pl.BlockSpec((tm, tk), lambda g, i, j, k: (i, k)),
            pl.BlockSpec((1, tn, tk), lambda g, i, j, k: (g, j, k)),
            pl.BlockSpec((1, 1, tn), lambda g, i, j, k: (g, 0, j)),
        ],
        out_specs=pl.BlockSpec((1, tm, tn), lambda g, i, j, k: (g, i, j)),
        scratch_shapes=[pltpu.VMEM((tm, tn), jnp.float32)],
        compiler_params=pltpu.CompilerParams(
            dimension_semantics=("parallel", "parallel", "parallel", "arbitrary")),
    )(x2d, w3, b3)


# ---------------------------------------------------------------------------
# Flash-style causal attention over all heads of a query tile
# ---------------------------------------------------------------------------
def _flash_attn_kernel(q_ref, k_ref, v_ref, o_ref, m_sc, l_sc, acc_sc, *,
                       num_heads, head_dim, tq, tkv):
    qi = pl.program_id(1)
    ki = pl.program_id(2)

    @pl.when(ki == 0)
    def _init():
        m_sc[...] = jnp.full_like(m_sc, _MASK_VALUE)
        l_sc[...] = jnp.zeros_like(l_sc)
        acc_sc[...] = jnp.zeros_like(acc_sc)

    # causal block skip: only KV blocks intersecting the lower triangle
    @pl.when(ki * tkv < (qi + 1) * tq)
    def _compute():
        q = q_ref[0]          # (tq, H*hd)
        k = k_ref[0]          # (tkv, H*hd)
        v = v_ref[0]          # (tkv, H*hd)

        # global causal mask for this (q-block, kv-block); same for every head
        row = qi * tq + lax.broadcasted_iota(jnp.int32, (tq, tkv), 0)
        col = ki * tkv + lax.broadcasted_iota(jnp.int32, (tq, tkv), 1)
        masked = col > row

        # torch: attn_scores / head_dim**(-0.5)  ==  * sqrt(head_dim)
        scale = jnp.float32(head_dim ** 0.5)

        for h in range(num_heads):          # static unroll; hd < 128 underfills MXU
            sl = slice(h * head_dim, (h + 1) * head_dim)
            qh, kh, vh = q[:, sl], k[:, sl], v[:, sl]

            # q @ k^T (contract last dims; no in-kernel transpose)
            s = lax.dot_general(qh, kh, (((1,), (1,)), ((), ())),
                                preferred_element_type=jnp.float32) * scale
            s = jnp.where(masked, jnp.float32(_MASK_VALUE), s)

            m_prev = m_sc[:, h:h + 1]                                   # (tq, 1)
            m_new = jnp.maximum(m_prev, jnp.max(s, axis=-1, keepdims=True))
            alpha = jnp.exp(m_prev - m_new)
            p = jnp.exp(s - m_new)                                      # (tq, tkv)

            l_sc[:, h:h + 1] = alpha * l_sc[:, h:h + 1] + jnp.sum(p, axis=-1,
                                                                  keepdims=True)
            acc_sc[:, sl] = alpha * acc_sc[:, sl] + lax.dot_general(
                p, vh, (((1,), (0,)), ((), ())),
                preferred_element_type=jnp.float32)
            m_sc[:, h:h + 1] = m_new

    @pl.when(ki == pl.num_programs(2) - 1)
    def _finalize():
        # normalize per head, then ONE lane-dense (tq, H*hd) store
        parts = []
        for h in range(num_heads):
            sl = slice(h * head_dim, (h + 1) * head_dim)
            inv = pl.reciprocal(l_sc[:, h:h + 1], approx=True)   # EUP slot
            parts.append(acc_sc[:, sl] * inv)
        out = parts[0] if num_heads == 1 else jnp.concatenate(parts, axis=-1)
        o_ref[...] = out.astype(o_ref.dtype)


def attention_pallas(qkv3, batch, seq, num_heads, head_dim):
    """qkv3: (3, batch*seq, d_out) -> context (batch*seq, d_out), heads merged."""
    d_out = num_heads * head_dim
    assert seq % 8 == 0, "sequence length must be a multiple of 8 for TPU tiling"
    tq = _seq_tile(seq)
    tkv = tq                       # equal q/kv tiles => no fully-masked rows in a
    nq = seq // tq                 # processed block (finite mask stays exact)
    nkv = seq // tkv

    kernel = functools.partial(_flash_attn_kernel, num_heads=num_heads,
                               head_dim=head_dim, tq=tq, tkv=tkv)
    return pl.pallas_call(
        kernel,
        out_shape=jax.ShapeDtypeStruct((batch * seq, d_out), jnp.float32),
        grid=(batch, nq, nkv),
        in_specs=[
            pl.BlockSpec((1, tq, d_out), lambda b, qi, ki: (0, b * nq + qi, 0)),
            pl.BlockSpec((1, tkv, d_out), lambda b, qi, ki: (1, b * nkv + ki, 0)),
            pl.BlockSpec((1, tkv, d_out), lambda b, qi, ki: (2, b * nkv + ki, 0)),
        ],
        out_specs=pl.BlockSpec((tq, d_out), lambda b, qi, ki: (b * nq + qi, 0)),
        scratch_shapes=[
            pltpu.VMEM((tq, num_heads), jnp.float32),   # running max
            pltpu.VMEM((tq, num_heads), jnp.float32),   # running denom
            pltpu.VMEM((tq, d_out), jnp.float32),       # output accumulator
        ],
        compiler_params=pltpu.CompilerParams(
            dimension_semantics=("parallel", "parallel", "arbitrary")),
    )(qkv3, qkv3, qkv3)


# ---------------------------------------------------------------------------
# Full forward pass
# ---------------------------------------------------------------------------
def mha_combined_qkv(x, w_qkv, b_qkv, w_proj, b_proj, num_heads):
    """x: (B, T, d_in); w_qkv: (3*d_out, d_in); w_proj: (d_out, d_out)."""
    B, T, d_in = x.shape
    d_out = w_qkv.shape[0] // 3
    assert d_out % num_heads == 0
    head_dim = d_out // num_heads

    x2d = x.reshape(B * T, d_in)
    qkv3 = qkv_proj_pallas(x2d, w_qkv, b_qkv, d_out)          # (3, B*T, d_out)
    ctx = attention_pallas(qkv3, B, T, num_heads, head_dim)   # (B*T, d_out)
    out = linear_pallas(ctx, w_proj, b_proj)                  # (B*T, d_out)
    return out.reshape(B, T, d_out)


# ---------------------------------------------------------------------------
# Pure-JAX reference (mirrors the PyTorch module)
# ---------------------------------------------------------------------------
def _reference(x, w_qkv, b_qkv, w_proj, b_proj, num_heads):
    B, T, _ = x.shape
    d_out = w_qkv.shape[0] // 3
    hd = d_out // num_heads
    qkv = x @ w_qkv.T + b_qkv
    qkv = qkv.reshape(B, T, 3, num_heads, hd).transpose(2, 0, 3, 1, 4)
    q, k, v = qkv[0], qkv[1], qkv[2]
    s = jnp.einsum("bhqd,bhkd->bhqk", q, k)
    mask = jnp.triu(jnp.ones((T, T), dtype=bool), k=1)
    s = jnp.where(mask, -jnp.inf, s)
    w = jax.nn.softmax(s / hd ** (-0.5), axis=-1)   # reproduces torch scaling
    ctx = jnp.einsum("bhqk,bhkd->bhqd", w, v)
    ctx = ctx.transpose(0, 2, 1, 3).reshape(B, T, d_out)
    return ctx @ w_proj.T + b_proj


# ---------------------------------------------------------------------------
# Demo
# ---------------------------------------------------------------------------
if __name__ == "__main__":
    B, T = 2, 8
    d_in = d_out = 32
    num_heads = 4

    key = jax.random.PRNGKey(0)
    k_x, k_wqkv, k_wproj, k_bproj = jax.random.split(key, 4)

    x = jax.random.normal(k_x, (B, T, d_in), dtype=jnp.float32)

    lim_qkv = 1.0 / math.sqrt(d_in)
    w_qkv = jax.random.uniform(k_wqkv, (3 * d_out, d_in),
                               minval=-lim_qkv, maxval=lim_qkv, dtype=jnp.float32)
    b_qkv = jnp.zeros((3 * d_out,), dtype=jnp.float32)   # qkv_bias=False

    lim_proj = 1.0 / math.sqrt(d_out)
    w_proj = jax.random.uniform(k_wproj, (d_out, d_out),
                                minval=-lim_proj, maxval=lim_proj, dtype=jnp.float32)
    b_proj = jax.random.uniform(k_bproj, (d_out,),
                                minval=-lim_proj, maxval=lim_proj, dtype=jnp.float32)

    fwd = jax.jit(functools.partial(mha_combined_qkv, num_heads=num_heads))
    out = fwd(x, w_qkv, b_qkv, w_proj, b_proj)
    jax.block_until_ready(out)

    ref = _reference(x, w_qkv, b_qkv, w_proj, b_proj, num_heads)
    assert out.shape == (B, T, d_out)
    assert bool(jnp.all(jnp.isfinite(out)))
    assert bool(jnp.allclose(out, ref, atol=3e-2, rtol=3e-2)), \
        float(jnp.max(jnp.abs(out - ref)))
    print("KERNEL_OK")
</pallas_src>

<mosaic_0001>
module attributes {stable_mosaic.version = 11 : i64} {
  func.func @_flash_attn_kernel(%arg0: i32, %arg1: i32, %arg2: i32, %arg3: memref<1x8x32xf32, #tpu.memory_space<vmem>>, %arg4: memref<1x8x32xf32, #tpu.memory_space<vmem>>, %arg5: memref<1x8x32xf32, #tpu.memory_space<vmem>>, %arg6: memref<8x32xf32, #tpu.memory_space<vmem>>, %arg7: memref<8x4xf32, #tpu.memory_space<vmem>>, %arg8: memref<8x4xf32, #tpu.memory_space<vmem>>, %arg9: memref<8x32xf32, #tpu.memory_space<vmem>>) attributes {dimension_semantics = [#tpu.dimension_semantics<parallel>, #tpu.dimension_semantics<parallel>, #tpu.dimension_semantics<arbitrary>], iteration_bounds = array<i64: 2, 1, 1>, scalar_prefetch = 0 : i64, scratch_operands = 3 : i64, tpu.core_type = #tpu.core_type<tc>, window_params = [{transform_indices = @transform_0, window_bounds = array<i64: 1, 8, 32>}, {transform_indices = @transform_1, window_bounds = array<i64: 1, 8, 32>}, {transform_indices = @transform_2, window_bounds = array<i64: 1, 8, 32>}, {transform_indices = @transform_3, window_bounds = array<i64: 8, 32>}]} {
    %c0_i32 = arith.constant 0 : i32
    %0 = arith.cmpi eq, %arg2, %c0_i32 : i32
    %1 = arith.extui %0 : i1 to i32
    %c0_i32_0 = arith.constant 0 : i32
    %2 = arith.cmpi ne, %1, %c0_i32_0 : i32
    scf.if %2 {
      %cst = arith.constant -1.000000e+30 : f32
      %12 = vector.broadcast %cst : f32 to vector<8x4xf32>
      %c0 = arith.constant 0 : index
      %c0_5 = arith.constant 0 : index
      %13 = vector.load %arg7[%c0, %c0_5] : memref<8x4xf32, #tpu.memory_space<vmem>>, vector<8x4xf32>
      tpu.vector_store %arg7[%c0, %c0_5], %12 {strides = array<i32>} : memref<8x4xf32, #tpu.memory_space<vmem>>, vector<8x4xf32>,
      %cst_6 = arith.constant 0.000000e+00 : f32
      %14 = vector.broadcast %cst_6 : f32 to vector<8x4xf32>
      %c0_7 = arith.constant 0 : index
      %c0_8 = arith.constant 0 : index
      %15 = vector.load %arg8[%c0_7, %c0_8] : memref<8x4xf32, #tpu.memory_space<vmem>>, vector<8x4xf32>
      tpu.vector_store %arg8[%c0_7, %c0_8], %14 {strides = array<i32>} : memref<8x4xf32, #tpu.memory_space<vmem>>, vector<8x4xf32>,
      %cst_9 = arith.constant 0.000000e+00 : f32
      %16 = vector.broadcast %cst_9 : f32 to vector<8x32xf32>
      %c0_10 = arith.constant 0 : index
      %c0_11 = arith.constant 0 : index
      %17 = vector.load %arg9[%c0_10, %c0_11] : memref<8x32xf32, #tpu.memory_space<vmem>>, vector<8x32xf32>
      tpu.vector_store %arg9[%c0_10, %c0_11], %16 {strides = array<i32>} : memref<8x32xf32, #tpu.memory_space<vmem>>, vector<8x32xf32>,
    } else {
    }
    %c8_i32 = arith.constant 8 : i32
    %3 = arith.muli %arg2, %c8_i32 : i32
    %c1_i32 = arith.constant 1 : i32
    %4 = arith.addi %arg1, %c1_i32 : i32
    %c8_i32_1 = arith.constant 8 : i32
    %5 = arith.muli %4, %c8_i32_1 : i32
    %6 = arith.cmpi slt, %3, %5 : i32
    %7 = arith.extui %6 : i1 to i32
    %c0_i32_2 = arith.constant 0 : i32
    %8 = arith.cmpi ne, %7, %c0_i32_2 : i32
    scf.if %8 {
      %c0 = arith.constant 0 : index
      %c0_5 = arith.constant 0 : index
      %c0_6 = arith.constant 0 : index
      %12 = vector.load %arg3[%c0, %c0_5, %c0_6] : memref<1x8x32xf32, #tpu.memory_space<vmem>>, vector<1x8x32xf32>
      %13 = vector.shape_cast %12 : vector<1x8x32xf32> to vector<8x32xf32>
      %c0_7 = arith.constant 0 : index
      %c0_8 = arith.constant 0 : index
      %c0_9 = arith.constant 0 : index
      %14 = vector.load %arg4[%c0_7, %c0_8, %c0_9] : memref<1x8x32xf32, #tpu.memory_space<vmem>>, vector<1x8x32xf32>
      %15 = vector.shape_cast %14 : vector<1x8x32xf32> to vector<8x32xf32>
      %c0_10 = arith.constant 0 : index
      %c0_11 = arith.constant 0 : index
      %c0_12 = arith.constant 0 : index
      %16 = vector.load %arg5[%c0_10, %c0_11, %c0_12] : memref<1x8x32xf32, #tpu.memory_space<vmem>>, vector<1x8x32xf32>
      %17 = vector.shape_cast %16 : vector<1x8x32xf32> to vector<8x32xf32>
      %c8_i32_13 = arith.constant 8 : i32
      %18 = arith.muli %arg1, %c8_i32_13 : i32
      %19 = tpu.iota {dimensions = array<i32: 0>} : vector<8x8xi32>
      %20 = vector.broadcast %18 : i32 to vector<8x8xi32>
      %21 = arith.addi %20, %19 : vector<8x8xi32>
      %c8_i32_14 = arith.constant 8 : i32
      %22 = arith.muli %arg2, %c8_i32_14 : i32
      %23 = tpu.iota {dimensions = array<i32: 1>} : vector<8x8xi32>
      %24 = vector.broadcast %22 : i32 to vector<8x8xi32>
      %25 = arith.addi %24, %23 : vector<8x8xi32>
      %26 = arith.cmpi sgt, %25, %21 : vector<8x8xi32>
      %27 = vector.extract_strided_slice %13 {offsets = [0, 0], sizes = [8, 8], strides = [1, 1]} : vector<8x32xf32> to vector<8x8xf32>
      %28 = vector.extract_strided_slice %15 {offsets = [0, 0], sizes = [8, 8], strides = [1, 1]} : vector<8x32xf32> to vector<8x8xf32>
      %29 = vector.extract_strided_slice %17 {offsets = [0, 0], sizes = [8, 8], strides = [1, 1]} : vector<8x32xf32> to vector<8x8xf32>
      %cst = arith.constant dense<0.000000e+00> : vector<8x8xf32>
      %30 = tpu.matmul %27, %28, %cst {dimension_numbers = #tpu.dot_dimension_numbers<[1], [1], [0], [0], [0, 0, 1, 0], [], []>} : vector<8x8xf32>, vector<8x8xf32>, vector<8x8xf32> -> vector<8x8xf32>
      %cst_15 = arith.constant 2.82842708 : f32
      %31 = vector.broadcast %cst_15 : f32 to vector<8x8xf32>
      %32 = arith.mulf %30, %31 : vector<8x8xf32>
      %cst_16 = arith.constant -1.000000e+30 : f32
      %33 = vector.broadcast %cst_16 : f32 to vector<8x8xf32>
      %34 = arith.select %26, %33, %32 : vector<8x8xi1>, vector<8x8xf32>
      %c0_17 = arith.constant 0 : index
      %c0_18 = arith.constant 0 : index
      %35 = vector.load %arg7[%c0_17, %c0_18] : memref<8x4xf32, #tpu.memory_space<vmem>>, vector<8x1xf32>
      %cst_19 = arith.constant dense<0xFF800000> : vector<8xf32>
      %36 = vector.multi_reduction <maximumf>, %34, %cst_19 [1] : vector<8x8xf32> to vector<8xf32>
      %37 = vector.shape_cast %36 : vector<8xf32> to vector<8x1xf32>
      %38 = arith.maximumf %35, %37 : vector<8x1xf32>
      %39 = arith.subf %35, %38 : vector<8x1xf32>
      %40 = math.exp %39 : vector<8x1xf32>
      %41 = vector.broadcast %38 : vector<8x1xf32> to vector<8x8xf32>
      %42 = arith.subf %34, %41 : vector<8x8xf32>
      %43 = math.exp %42 : vector<8x8xf32>
      %c0_20 = arith.constant 0 : index
      %c0_21 = arith.constant 0 : index
      %44 = vector.load %arg8[%c0_20, %c0_21] : memref<8x4xf32, #tpu.memory_space<vmem>>, vector<8x1xf32>
      %45 = arith.mulf %40, %44 : vector<8x1xf32>
      %cst_22 = arith.constant dense<0.000000e+00> : vector<8xf32>
      %46 = vector.multi_reduction <add>, %43, %cst_22 [1] : vector<8x8xf32> to vector<8xf32>
      %47 = vector.shape_cast %46 : vector<8xf32> to vector<8x1xf32>
      %48 = arith.addf %45, %47 : vector<8x1xf32>
      %c0_23 = arith.constant 0 : index
      %c0_24 = arith.constant 0 : index
      %49 = vector.load %arg8[%c0_23, %c0_24] : memref<8x4xf32, #tpu.memory_space<vmem>>, vector<8x1xf32>
      tpu.vector_store %arg8[%c0_23, %c0_24], %48 {strides = array<i32>} : memref<8x4xf32, #tpu.memory_space<vmem>>, vector<8x1xf32>,
      %c0_25 = arith.constant 0 : index
      %c0_26 = arith.constant 0 : index
      %50 = vector.load %arg9[%c0_25, %c0_26] : memref<8x32xf32, #tpu.memory_space<vmem>>, vector<8x8xf32>
      %51 = vector.broadcast %40 : vector<8x1xf32> to vector<8x8xf32>
      %52 = arith.mulf %51, %50 : vector<8x8xf32>
      %cst_27 = arith.constant dense<0.000000e+00> : vector<8x8xf32>
      %53 = tpu.matmul %43, %29, %cst_27 {dimension_numbers = #tpu.dot_dimension_numbers<[1], [0], [0], [1], [0, 0, 1, 1], [], []>} : vector<8x8xf32>, vector<8x8xf32>, vector<8x8xf32> -> vector<8x8xf32>
      %54 = arith.addf %52, %53 : vector<8x8xf32>
      %c0_28 = arith.constant 0 : index
      %c0_29 = arith.constant 0 : index
      %55 = vector.load %arg9[%c0_28, %c0_29] : memref<8x32xf32, #tpu.memory_space<vmem>>, vector<8x8xf32>
      tpu.vector_store %arg9[%c0_28, %c0_29], %54 {strides = array<i32>} : memref<8x32xf32, #tpu.memory_space<vmem>>, vector<8x8xf32>,
      %c0_30 = arith.constant 0 : index
      %c0_31 = arith.constant 0 : index
      %56 = vector.load %arg7[%c0_30, %c0_31] : memref<8x4xf32, #tpu.memory_space<vmem>>, vector<8x1xf32>
      tpu.vector_store %arg7[%c0_30, %c0_31], %38 {strides = array<i32>} : memref<8x4xf32, #tpu.memory_space<vmem>>, vector<8x1xf32>,
      %57 = vector.extract_strided_slice %13 {offsets = [0, 8], sizes = [8, 8], strides = [1, 1]} : vector<8x32xf32> to vector<8x8xf32>
      %58 = vector.extract_strided_slice %15 {offsets = [0, 8], sizes = [8, 8], strides = [1, 1]} : vector<8x32xf32> to vector<8x8xf32>
      %59 = vector.extract_strided_slice %17 {offsets = [0, 8], sizes = [8, 8], strides = [1, 1]} : vector<8x32xf32> to vector<8x8xf32>
      %cst_32 = arith.constant dense<0.000000e+00> : vector<8x8xf32>
      %60 = tpu.matmul %57, %58, %cst_32 {dimension_numbers = #tpu.dot_dimension_numbers<[1], [1], [0], [0], [0, 0, 1, 0], [], []>} : vector<8x8xf32>, vector<8x8xf32>, vector<8x8xf32> -> vector<8x8xf32>
      %cst_33 = arith.constant 2.82842708 : f32
      %61 = vector.broadcast %cst_33 : f32 to vector<8x8xf32>
      %62 = arith.mulf %60, %61 : vector<8x8xf32>
      %cst_34 = arith.constant -1.000000e+30 : f32
      %63 = vector.broadcast %cst_34 : f32 to vector<8x8xf32>
      %64 = arith.select %26, %63, %62 : vector<8x8xi1>, vector<8x8xf32>
      %c0_35 = arith.constant 0 : index
      %c1 = arith.constant 1 : index
      %65 = vector.load %arg7[%c0_35, %c1] : memref<8x4xf32, #tpu.memory_space<vmem>>, vector<8x1xf32>
      %cst_36 = arith.constant dense<0xFF800000> : vector<8xf32>
      %66 = vector.multi_reduction <maximumf>, %64, %cst_36 [1] : vector<8x8xf32> to vector<8xf32>
      %67 = vector.shape_cast %66 : vector<8xf32> to vector<8x1xf32>
      %68 = arith.maximumf %65, %67 : vector<8x1xf32>
      %69 = arith.subf %65, %68 : vector<8x1xf32>
      %70 = math.exp %69 : vector<8x1xf32>
      %71 = vector.broadcast %68 : vector<8x1xf32> to vector<8x8xf32>
      %72 = arith.subf %64, %71 : vector<8x8xf32>
      %73 = math.exp %72 : vector<8x8xf32>
      %c0_37 = arith.constant 0 : index
      %c1_38 = arith.constant 1 : index
      %74 = vector.load %arg8[%c0_37, %c1_38] : memref<8x4xf32, #tpu.memory_space<vmem>>, vector<8x1xf32>
      %75 = arith.mulf %70, %74 : vector<8x1xf32>
      %cst_39 = arith.constant dense<0.000000e+00> : vector<8xf32>
      %76 = vector.multi_reduction <add>, %73, %cst_39 [1] : vector<8x8xf32> to vector<8xf32>
      %77 = vector.shape_cast %76 : vector<8xf32> to vector<8x1xf32>
      %78 = arith.addf %75, %77 : vector<8x1xf32>
      %c0_40 = arith.constant 0 : index
      %c1_41 = arith.constant 1 : index
      %79 = vector.load %arg8[%c0_40, %c1_41] : memref<8x4xf32, #tpu.memory_space<vmem>>, vector<8x1xf32>
      tpu.vector_store %arg8[%c0_40, %c1_41], %78 {strides = array<i32>} : memref<8x4xf32, #tpu.memory_space<vmem>>, vector<8x1xf32>,
      %c0_42 = arith.constant 0 : index
      %c8 = arith.constant 8 : index
      %80 = vector.load %arg9[%c0_42, %c8] : memref<8x32xf32, #tpu.memory_space<vmem>>, vector<8x8xf32>
      %81 = vector.broadcast %70 : vector<8x1xf32> to vector<8x8xf32>
      %82 = arith.mulf %81, %80 : vector<8x8xf32>
      %cst_43 = arith.constant dense<0.000000e+00> : vector<8x8xf32>
      %83 = tpu.matmul %73, %59, %cst_43 {dimension_numbers = #tpu.dot_dimension_numbers<[1], [0], [0], [1], [0, 0, 1, 1], [], []>} : vector<8x8xf32>, vector<8x8xf32>, vector<8x8xf32> -> vector<8x8xf32>
      %84 = arith.addf %82, %83 : vector<8x8xf32>
      %c0_44 = arith.constant 0 : index
      %c8_45 = arith.constant 8 : index
      %85 = vector.load %arg9[%c0_44, %c8_45] : memref<8x32xf32, #tpu.memory_space<vmem>>, vector<8x8xf32>
      tpu.vector_store %arg9[%c0_44, %c8_45], %84 {strides = array<i32>} : memref<8x32xf32, #tpu.memory_space<vmem>>, vector<8x8xf32>,
      %c0_46 = arith.constant 0 : index
      %c1_47 = arith.constant 1 : index
      %86 = vector.load %arg7[%c0_46, %c1_47] : memref<8x4xf32, #tpu.memory_space<vmem>>, vector<8x1xf32>
      tpu.vector_store %arg7[%c0_46, %c1_47], %68 {strides = array<i32>} : memref<8x4xf32, #tpu.memory_space<vmem>>, vector<8x1xf32>,
      %87 = vector.extract_strided_slice %13 {offsets = [0, 16], sizes = [8, 8], strides = [1, 1]} : vector<8x32xf32> to vector<8x8xf32>
      %88 = vector.extract_strided_slice %15 {offsets = [0, 16], sizes = [8, 8], strides = [1, 1]} : vector<8x32xf32> to vector<8x8xf32>
      %89 = vector.extract_strided_slice %17 {offsets = [0, 16], sizes = [8, 8], strides = [1, 1]} : vector<8x32xf32> to vector<8x8xf32>
      %cst_48 = arith.constant dense<0.000000e+00> : vector<8x8xf32>
      %90 = tpu.matmul %87, %88, %cst_48 {dimension_numbers = #tpu.dot_dimension_numbers<[1], [1], [0], [0], [0, 0, 1, 0], [], []>} : vector<8x8xf32>, vector<8x8xf32>, vector<8x8xf32> -> vector<8x8xf32>
      %cst_49 = arith.constant 2.82842708 : f32
      %91 = vector.broadcast %cst_49 : f32 to vector<8x8xf32>
      %92 = arith.mulf %90, %91 : vector<8x8xf32>
      %cst_50 = arith.constant -1.000000e+30 : f32
      %93 = vector.broadcast %cst_50 : f32 to vector<8x8xf32>
      %94 = arith.select %26, %93, %92 : vector<8x8xi1>, vector<8x8xf32>
      %c0_51 = arith.constant 0 : index
      %c2 = arith.constant 2 : index
      %95 = vector.load %arg7[%c0_51, %c2] : memref<8x4xf32, #tpu.memory_space<vmem>>, vector<8x1xf32>
      %cst_52 = arith.constant dense<0xFF800000> : vector<8xf32>
      %96 = vector.multi_reduction <maximumf>, %94, %cst_52 [1] : vector<8x8xf32> to vector<8xf32>
      %97 = vector.shape_cast %96 : vector<8xf32> to vector<8x1xf32>
      %98 = arith.maximumf %95, %97 : vector<8x1xf32>
      %99 = arith.subf %95, %98 : vector<8x1xf32>
      %100 = math.exp %99 : vector<8x1xf32>
      %101 = vector.broadcast %98 : vector<8x1xf32> to vector<8x8xf32>
      %102 = arith.subf %94, %101 : vector<8x8xf32>
      %103 = math.exp %102 : vector<8x8xf32>
      %c0_53 = arith.constant 0 : index
      %c2_54 = arith.constant 2 : index
      %104 = vector.load %arg8[%c0_53, %c2_54] : memref<8x4xf32, #tpu.memory_space<vmem>>, vector<8x1xf32>
      %105 = arith.mulf %100, %104 : vector<8x1xf32>
      %cst_55 = arith.constant dense<0.000000e+00> : vector<8xf32>
      %106 = vector.multi_reduction <add>, %103, %cst_55 [1] : vector<8x8xf32> to vector<8xf32>
      %107 = vector.shape_cast %106 : vector<8xf32> to vector<8x1xf32>
      %108 = arith.addf %105, %107 : vector<8x1xf32>
      %c0_56 = arith.constant 0 : index
      %c2_57 = arith.constant 2 : index
      %109 = vector.load %arg8[%c0_56, %c2_57] : memref<8x4xf32, #tpu.memory_space<vmem>>, vector<8x1xf32>
      tpu.vector_store %arg8[%c0_56, %c2_57], %108 {strides = array<i32>} : memref<8x4xf32, #tpu.memory_space<vmem>>, vector<8x1xf32>,
      %c0_58 = arith.constant 0 : index
      %c16 = arith.constant 16 : index
      %110 = vector.load %arg9[%c0_58, %c16] : memref<8x32xf32, #tpu.memory_space<vmem>>, vector<8x8xf32>
      %111 = vector.broadcast %100 : vector<8x1xf32> to vector<8x8xf32>
      %112 = arith.mulf %111, %110 : vector<8x8xf32>
      %cst_59 = arith.constant dense<0.000000e+00> : vector<8x8xf32>
      %113 = tpu.matmul %103, %89, %cst_59 {dimension_numbers = #tpu.dot_dimension_numbers<[1], [0], [0], [1], [0, 0, 1, 1], [], []>} : vector<8x8xf32>, vector<8x8xf32>, vector<8x8xf32> -> vector<8x8xf32>
      %114 = arith.addf %112, %113 : vector<8x8xf32>
      %c0_60 = arith.constant 0 : index
      %c16_61 = arith.constant 16 : index
      %115 = vector.load %arg9[%c0_60, %c16_61] : memref<8x32xf32, #tpu.memory_space<vmem>>, vector<8x8xf32>
      tpu.vector_store %arg9[%c0_60, %c16_61], %114 {strides = array<i32>} : memref<8x32xf32, #tpu.memory_space<vmem>>, vector<8x8xf32>,
      %c0_62 = arith.constant 0 : index
      %c2_63 = arith.constant 2 : index
      %116 = vector.load %arg7[%c0_62, %c2_63] : memref<8x4xf32, #tpu.memory_space<vmem>>, vector<8x1xf32>
      tpu.vector_store %arg7[%c0_62, %c2_63], %98 {strides = array<i32>} : memref<8x4xf32, #tpu.memory_space<vmem>>, vector<8x1xf32>,
      %117 = vector.extract_strided_slice %13 {offsets = [0, 24], sizes = [8, 8], strides = [1, 1]} : vector<8x32xf32> to vector<8x8xf32>
      %118 = vector.extract_strided_slice %15 {offsets = [0, 24], sizes = [8, 8], strides = [1, 1]} : vector<8x32xf32> to vector<8x8xf32>
      %119 = vector.extract_strided_slice %17 {offsets = [0, 24], sizes = [8, 8], strides = [1, 1]} : vector<8x32xf32> to vector<8x8xf32>
      %cst_64 = arith.constant dense<0.000000e+00> : vector<8x8xf32>
      %120 = tpu.matmul %117, %118, %cst_64 {dimension_numbers = #tpu.dot_dimension_numbers<[1], [1], [0], [0], [0, 0, 1, 0], [], []>} : vector<8x8xf32>, vector<8x8xf32>, vector<8x8xf32> -> vector<8x8xf32>
      %cst_65 = arith.constant 2.82842708 : f32
      %121 = vector.broadcast %cst_65 : f32 to vector<8x8xf32>
      %122 = arith.mulf %120, %121 : vector<8x8xf32>
      %cst_66 = arith.constant -1.000000e+30 : f32
      %123 = vector.broadcast %cst_66 : f32 to vector<8x8xf32>
      %124 = arith.select %26, %123, %122 : vector<8x8xi1>, vector<8x8xf32>
      %c0_67 = arith.constant 0 : index
      %c3 = arith.constant 3 : index
      %125 = vector.load %arg7[%c0_67, %c3] : memref<8x4xf32, #tpu.memory_space<vmem>>, vector<8x1xf32>
      %cst_68 = arith.constant dense<0xFF800000> : vector<8xf32>
      %126 = vector.multi_reduction <maximumf>, %124, %cst_68 [1] : vector<8x8xf32> to vector<8xf32>
      %127 = vector.shape_cast %126 : vector<8xf32> to vector<8x1xf32>
      %128 = arith.maximumf %125, %127 : vector<8x1xf32>
      %129 = arith.subf %125, %128 : vector<8x1xf32>
      %130 = math.exp %129 : vector<8x1xf32>
      %131 = vector.broadcast %128 : vector<8x1xf32> to vector<8x8xf32>
      %132 = arith.subf %124, %131 : vector<8x8xf32>
      %133 = math.exp %132 : vector<8x8xf32>
      %c0_69 = arith.constant 0 : index
      %c3_70 = arith.constant 3 : index
      %134 = vector.load %arg8[%c0_69, %c3_70] : memref<8x4xf32, #tpu.memory_space<vmem>>, vector<8x1xf32>
      %135 = arith.mulf %130, %134 : vector<8x1xf32>
      %cst_71 = arith.constant dense<0.000000e+00> : vector<8xf32>
      %136 = vector.multi_reduction <add>, %133, %cst_71 [1] : vector<8x8xf32> to vector<8xf32>
      %137 = vector.shape_cast %136 : vector<8xf32> to vector<8x1xf32>
      %138 = arith.addf %135, %137 : vector<8x1xf32>
      %c0_72 = arith.constant 0 : index
      %c3_73 = arith.constant 3 : index
      %139 = vector.load %arg8[%c0_72, %c3_73] : memref<8x4xf32, #tpu.memory_space<vmem>>, vector<8x1xf32>
      tpu.vector_store %arg8[%c0_72, %c3_73], %138 {strides = array<i32>} : memref<8x4xf32, #tpu.memory_space<vmem>>, vector<8x1xf32>,
      %c0_74 = arith.constant 0 : index
      %c24 = arith.constant 24 : index
      %140 = vector.load %arg9[%c0_74, %c24] : memref<8x32xf32, #tpu.memory_space<vmem>>, vector<8x8xf32>
      %141 = vector.broadcast %130 : vector<8x1xf32> to vector<8x8xf32>
      %142 = arith.mulf %141, %140 : vector<8x8xf32>
      %cst_75 = arith.constant dense<0.000000e+00> : vector<8x8xf32>
      %143 = tpu.matmul %133, %119, %cst_75 {dimension_numbers = #tpu.dot_dimension_numbers<[1], [0], [0], [1], [0, 0, 1, 1], [], []>} : vector<8x8xf32>, vector<8x8xf32>, vector<8x8xf32> -> vector<8x8xf32>
      %144 = arith.addf %142, %143 : vector<8x8xf32>
      %c0_76 = arith.constant 0 : index
      %c24_77 = arith.constant 24 : index
      %145 = vector.load %arg9[%c0_76, %c24_77] : memref<8x32xf32, #tpu.memory_space<vmem>>, vector<8x8xf32>
      tpu.vector_store %arg9[%c0_76, %c24_77], %144 {strides = array<i32>} : memref<8x32xf32, #tpu.memory_space<vmem>>, vector<8x8xf32>,
      %c0_78 = arith.constant 0 : index
      %c3_79 = arith.constant 3 : index
      %146 = vector.load %arg7[%c0_78, %c3_79] : memref<8x4xf32, #tpu.memory_space<vmem>>, vector<8x1xf32>
      tpu.vector_store %arg7[%c0_78, %c3_79], %128 {strides = array<i32>} : memref<8x4xf32, #tpu.memory_space<vmem>>, vector<8x1xf32>,
    } else {
    }
    %c0_i32_3 = arith.constant 0 : i32
    %9 = arith.cmpi eq, %arg2, %c0_i32_3 : i32
    %10 = arith.extui %9 : i1 to i32
    %c0_i32_4 = arith.constant 0 : i32
    %11 = arith.cmpi ne, %10, %c0_i32_4 : i32
    scf.if %11 {
      %c0 = arith.constant 0 : index
      %c0_5 = arith.constant 0 : index
      %12 = vector.load %arg8[%c0, %c0_5] : memref<8x4xf32, #tpu.memory_space<vmem>>, vector<8x1xf32>
      %13 = tpu.reciprocal %12 {approx = true} : vector<8x1xf32> -> vector<8x1xf32>
      %c0_6 = arith.constant 0 : index
      %c0_7 = arith.constant 0 : index
      %14 = vector.load %arg9[%c0_6, %c0_7] : memref<8x32xf32, #tpu.memory_space<vmem>>, vector<8x8xf32>
      %15 = vector.broadcast %13 : vector<8x1xf32> to vector<8x8xf32>
      %16 = arith.mulf %14, %15 : vector<8x8xf32>
      %c0_8 = arith.constant 0 : index
      %c1 = arith.constant 1 : index
      %17 = vector.load %arg8[%c0_8, %c1] : memref<8x4xf32, #tpu.memory_space<vmem>>, vector<8x1xf32>
      %18 = tpu.reciprocal %17 {approx = true} : vector<8x1xf32> -> vector<8x1xf32>
      %c0_9 = arith.constant 0 : index
      %c8 = arith.constant 8 : index
      %19 = vector.load %arg9[%c0_9, %c8] : memref<8x32xf32, #tpu.memory_space<vmem>>, vector<8x8xf32>
      %20 = vector.broadcast %18 : vector<8x1xf32> to vector<8x8xf32>
      %21 = arith.mulf %19, %20 : vector<8x8xf32>
      %c0_10 = arith.constant 0 : index
      %c2 = arith.constant 2 : index
      %22 = vector.load %arg8[%c0_10, %c2] : memref<8x4xf32, #tpu.memory_space<vmem>>, vector<8x1xf32>
      %23 = tpu.reciprocal %22 {approx = true} : vector<8x1xf32> -> vector<8x1xf32>
      %c0_11 = arith.constant 0 : index
      %c16 = arith.constant 16 : index
      %24 = vector.load %arg9[%c0_11, %c16] : memref<8x32xf32, #tpu.memory_space<vmem>>, vector<8x8xf32>
      %25 = vector.broadcast %23 : vector<8x1xf32> to vector<8x8xf32>
      %26 = arith.mulf %24, %25 : vector<8x8xf32>
      %c0_12 = arith.constant 0 : index
      %c3 = arith.constant 3 : index
      %27 = vector.load %arg8[%c0_12, %c3] : memref<8x4xf32, #tpu.memory_space<vmem>>, vector<8x1xf32>
      %28 = tpu.reciprocal %27 {approx = true} : vector<8x1xf32> -> vector<8x1xf32>
      %c0_13 = arith.constant 0 : index
      %c24 = arith.constant 24 : index
      %29 = vector.load %arg9[%c0_13, %c24] : memref<8x32xf32, #tpu.memory_space<vmem>>, vector<8x8xf32>
      %30 = vector.broadcast %28 : vector<8x1xf32> to vector<8x8xf32>
      %31 = arith.mulf %29, %30 : vector<8x8xf32>
      %32 = tpu.concatenate %16, %21, %26, %31 in 1 : vector<8x8xf32>, vector<8x8xf32>, vector<8x8xf32>, vector<8x8xf32> -> vector<8x32xf32>
      %c0_14 = arith.constant 0 : index
      %c0_15 = arith.constant 0 : index
      %33 = vector.load %arg6[%c0_14, %c0_15] : memref<8x32xf32, #tpu.memory_space<vmem>>, vector<8x32xf32>
      tpu.vector_store %arg6[%c0_14, %c0_15], %32 {strides = array<i32>} : memref<8x32xf32, #tpu.memory_space<vmem>>, vector<8x32xf32>,
    } else {
    }
    return
  }
  func.func @transform_0(%arg0: i32, %arg1: i32, %arg2: i32) -> (i32, i32, i32) {
    %c1_i32 = arith.constant 1 : i32
    %0 = arith.muli %arg0, %c1_i32 : i32
    %1 = arith.addi %0, %arg1 : i32
    %c0_i32 = arith.constant 0 : i32
    %c0_i32_0 = arith.constant 0 : i32
    %c0_i32_1 = arith.constant 0 : i32
    return %c0_i32, %1, %c0_i32_0 : i32, i32, i32
  }
  func.func @transform_1(%arg0: i32, %arg1: i32, %arg2: i32) -> (i32, i32, i32) {
    %c1_i32 = arith.constant 1 : i32
    %0 = arith.muli %arg0, %c1_i32 : i32
    %1 = arith.addi %0, %arg2 : i32
    %c1_i32_0 = arith.constant 1 : i32
    %c0_i32 = arith.constant 0 : i32
    %c0_i32_1 = arith.constant 0 : i32
    return %c1_i32_0, %1, %c0_i32 : i32, i32, i32
  }
  func.func @transform_2(%arg0: i32, %arg1: i32, %arg2: i32) -> (i32, i32, i32) {
    %c1_i32 = arith.constant 1 : i32
    %0 = arith.muli %arg0, %c1_i32 : i32
    %1 = arith.addi %0, %arg2 : i32
    %c2_i32 = arith.constant 2 : i32
    %c0_i32 = arith.constant 0 : i32
    %c0_i32_0 = arith.constant 0 : i32
    return %c2_i32, %1, %c0_i32 : i32, i32, i32
  }
  func.func @transform_3(%arg0: i32, %arg1: i32, %arg2: i32) -> (i32, i32) {
    %c1_i32 = arith.constant 1 : i32
    %0 = arith.muli %arg0, %c1_i32 : i32
    %1 = arith.addi %0, %arg1 : i32
    %c0_i32 = arith.constant 0 : i32
    %c0_i32_0 = arith.constant 0 : i32
    return %1, %c0_i32 : i32, i32
  }
}

module attributes {stable_mosaic.version = 11 : i64} {
  func.func @_qkv_proj_kernel(%arg0: i32, %arg1: i32, %arg2: i32, %arg3: i32, %arg4: memref<16x32xf32, #tpu.memory_space<vmem>>, %arg5: memref<1x32x32xf32, #tpu.memory_space<vmem>>, %arg6: memref<1x1x32xf32, #tpu.memory_space<vmem>>, %arg7: memref<1x16x32xf32, #tpu.memory_space<vmem>>, %arg8: memref<16x32xf32, #tpu.memory_space<vmem>>) attributes {dimension_semantics = [#tpu.dimension_semantics<parallel>, #tpu.dimension_semantics<parallel>, #tpu.dimension_semantics<parallel>, #tpu.dimension_semantics<arbitrary>], iteration_bounds = array<i64: 3, 1, 1, 1>, scalar_prefetch = 0 : i64, scratch_operands = 1 : i64, tpu.core_type = #tpu.core_type<tc>, window_params = [{transform_indices = @transform_0, window_bounds = array<i64: 16, 32>}, {transform_indices = @transform_1, window_bounds = array<i64: 1, 32, 32>}, {transform_indices = @transform_2, window_bounds = array<i64: 1, 1, 32>}, {transform_indices = @transform_3, window_bounds = array<i64: 1, 16, 32>}]} {
    %c0_i32 = arith.constant 0 : i32
    %0 = arith.cmpi eq, %arg3, %c0_i32 : i32
    %1 = arith.extui %0 : i1 to i32
    %c0_i32_0 = arith.constant 0 : i32
    %2 = arith.cmpi ne, %1, %c0_i32_0 : i32
    scf.if %2 {
      %cst_11 = arith.constant 0.000000e+00 : f32
      %13 = vector.broadcast %cst_11 : f32 to vector<16x32xf32>
      %c0_12 = arith.constant 0 : index
      %c0_13 = arith.constant 0 : index
      %14 = vector.load %arg8[%c0_12, %c0_13] : memref<16x32xf32, #tpu.memory_space<vmem>>, vector<16x32xf32>
      tpu.vector_store %arg8[%c0_12, %c0_13], %13 {strides = array<i32>} : memref<16x32xf32, #tpu.memory_space<vmem>>, vector<16x32xf32>,
    } else {
    }
    %c0 = arith.constant 0 : index
    %c0_1 = arith.constant 0 : index
    %3 = vector.load %arg8[%c0, %c0_1] : memref<16x32xf32, #tpu.memory_space<vmem>>, vector<16x32xf32>
    %c0_2 = arith.constant 0 : index
    %c0_3 = arith.constant 0 : index
    %4 = vector.load %arg4[%c0_2, %c0_3] : memref<16x32xf32, #tpu.memory_space<vmem>>, vector<16x32xf32>
    %c0_4 = arith.constant 0 : index
    %c0_5 = arith.constant 0 : index
    %c0_6 = arith.constant 0 : index
    %5 = vector.load %arg5[%c0_4, %c0_5, %c0_6] : memref<1x32x32xf32, #tpu.memory_space<vmem>>, vector<1x32x32xf32>
    %6 = vector.shape_cast %5 : vector<1x32x32xf32> to vector<32x32xf32>
    %cst = arith.constant dense<0.000000e+00> : vector<16x32xf32>
    %7 = tpu.matmul %4, %6, %cst {dimension_numbers = #tpu.dot_dimension_numbers<[1], [1], [0], [0], [0, 0, 1, 0], [], []>} : vector<16x32xf32>, vector<32x32xf32>, vector<16x32xf32> -> vector<16x32xf32>
    %8 = arith.addf %3, %7 : vector<16x32xf32>
    %c0_7 = arith.constant 0 : index
    %c0_8 = arith.constant 0 : index
    %9 = vector.load %arg8[%c0_7, %c0_8] : memref<16x32xf32, #tpu.memory_space<vmem>>, vector<16x32xf32>
    tpu.vector_store %arg8[%c0_7, %c0_8], %8 {strides = array<i32>} : memref<16x32xf32, #tpu.memory_space<vmem>>, vector<16x32xf32>,
    %c0_i32_9 = arith.constant 0 : i32
    %10 = arith.cmpi eq, %arg3, %c0_i32_9 : i32
    %11 = arith.extui %10 : i1 to i32
    %c0_i32_10 = arith.constant 0 : i32
    %12 = arith.cmpi ne, %11, %c0_i32_10 : i32
    scf.if %12 {
      %c0_11 = arith.constant 0 : index
      %c0_12 = arith.constant 0 : index
      %13 = vector.load %arg8[%c0_11, %c0_12] : memref<16x32xf32, #tpu.memory_space<vmem>>, vector<16x32xf32>
      %c0_13 = arith.constant 0 : index
      %c0_14 = arith.constant 0 : index
      %c0_15 = arith.constant 0 : index
      %14 = vector.load %arg6[%c0_13, %c0_14, %c0_15] : memref<1x1x32xf32, #tpu.memory_space<vmem>>, vector<1x1x32xf32>
      %15 = vector.shape_cast %14 : vector<1x1x32xf32> to vector<1x32xf32>
      %16 = vector.broadcast %15 : vector<1x32xf32> to vector<16x32xf32>
      %17 = arith.addf %13, %16 : vector<16x32xf32>
      %c0_16 = arith.constant 0 : index
      %c0_17 = arith.constant 0 : index
      %c0_18 = arith.constant 0 : index
      %18 = vector.load %arg7[%c0_16, %c0_17, %c0_18] : memref<1x16x32xf32, #tpu.memory_space<vmem>>, vector<1x16x32xf32>
      %19 = vector.shape_cast %18 : vector<1x16x32xf32> to vector<16x32xf32>
      %20 = vector.shape_cast %17 : vector<16x32xf32> to vector<1x16x32xf32>
      tpu.vector_store %arg7[%c0_16, %c0_17, %c0_18], %20 {strides = array<i32>} : memref<1x16x32xf32, #tpu.memory_space<vmem>>, vector<1x16x32xf32>,
    } else {
    }
    return
  }
  func.func @transform_0(%arg0: i32, %arg1: i32, %arg2: i32, %arg3: i32) -> (i32, i32) {
    %c0_i32 = arith.constant 0 : i32
    return %arg1, %arg3 : i32, i32
  }
  func.func @transform_1(%arg0: i32, %arg1: i32, %arg2: i32, %arg3: i32) -> (i32, i32, i32) {
    %c0_i32 = arith.constant 0 : i32
    return %arg0, %arg2, %arg3 : i32, i32, i32
  }
  func.func @transform_2(%arg0: i32, %arg1: i32, %arg2: i32, %arg3: i32) -> (i32, i32, i32) {
    %c0_i32 = arith.constant 0 : i32
    %c0_i32_0 = arith.constant 0 : i32
    return %arg0, %c0_i32, %arg2 : i32, i32, i32
  }
  func.func @transform_3(%arg0: i32, %arg1: i32, %arg2: i32, %arg3: i32) -> (i32, i32, i32) {
    %c0_i32 = arith.constant 0 : i32
    return %arg0, %arg1, %arg2 : i32, i32, i32
  }
}

module attributes {stable_mosaic.version = 11 : i64} {
  func.func @_linear_kernel(%arg0: i32, %arg1: i32, %arg2: i32, %arg3: memref<16x32xf32, #tpu.memory_space<vmem>>, %arg4: memref<32x32xf32, #tpu.memory_space<vmem>>, %arg5: memref<1x32xf32, #tpu.memory_space<vmem>>, %arg6: memref<16x32xf32, #tpu.memory_space<vmem>>, %arg7: memref<16x32xf32, #tpu.memory_space<vmem>>) attributes {dimension_semantics = [#tpu.dimension_semantics<parallel>, #tpu.dimension_semantics<parallel>, #tpu.dimension_semantics<arbitrary>], iteration_bounds = array<i64: 1, 1, 1>, scalar_prefetch = 0 : i64, scratch_operands = 1 : i64, tpu.core_type = #tpu.core_type<tc>, window_params = [{transform_indices = @transform_0, window_bounds = array<i64: 16, 32>}, {transform_indices = @transform_1, window_bounds = array<i64: 32, 32>}, {transform_indices = @transform_2, window_bounds = array<i64: 1, 32>}, {transform_indices = @transform_3, window_bounds = array<i64: 16, 32>}]} {
    %c0_i32 = arith.constant 0 : i32
    %0 = arith.cmpi eq, %arg2, %c0_i32 : i32
    %1 = arith.extui %0 : i1 to i32
    %c0_i32_0 = arith.constant 0 : i32
    %2 = arith.cmpi ne, %1, %c0_i32_0 : i32
    scf.if %2 {
      %cst_10 = arith.constant 0.000000e+00 : f32
      %12 = vector.broadcast %cst_10 : f32 to vector<16x32xf32>
      %c0_11 = arith.constant 0 : index
      %c0_12 = arith.constant 0 : index
      %13 = vector.load %arg7[%c0_11, %c0_12] : memref<16x32xf32, #tpu.memory_space<vmem>>, vector<16x32xf32>
      tpu.vector_store %arg7[%c0_11, %c0_12], %12 {strides = array<i32>} : memref<16x32xf32, #tpu.memory_space<vmem>>, vector<16x32xf32>,
    } else {
    }
    %c0 = arith.constant 0 : index
    %c0_1 = arith.constant 0 : index
    %3 = vector.load %arg7[%c0, %c0_1] : memref<16x32xf32, #tpu.memory_space<vmem>>, vector<16x32xf32>
    %c0_2 = arith.constant 0 : index
    %c0_3 = arith.constant 0 : index
    %4 = vector.load %arg3[%c0_2, %c0_3] : memref<16x32xf32, #tpu.memory_space<vmem>>, vector<16x32xf32>
    %c0_4 = arith.constant 0 : index
    %c0_5 = arith.constant 0 : index
    %5 = vector.load %arg4[%c0_4, %c0_5] : memref<32x32xf32, #tpu.memory_space<vmem>>, vector<32x32xf32>
    %cst = arith.constant dense<0.000000e+00> : vector<16x32xf32>
    %6 = tpu.matmul %4, %5, %cst {dimension_numbers = #tpu.dot_dimension_numbers<[1], [1], [0], [0], [0, 0, 1, 0], [], []>} : vector<16x32xf32>, vector<32x32xf32>, vector<16x32xf32> -> vector<16x32xf32>
    %7 = arith.addf %3, %6 : vector<16x32xf32>
    %c0_6 = arith.constant 0 : index
    %c0_7 = arith.constant 0 : index
    %8 = vector.load %arg7[%c0_6, %c0_7] : memref<16x32xf32, #tpu.memory_space<vmem>>, vector<16x32xf32>
    tpu.vector_store %arg7[%c0_6, %c0_7], %7 {strides = array<i32>} : memref<16x32xf32, #tpu.memory_space<vmem>>, vector<16x32xf32>,
    %c0_i32_8 = arith.constant 0 : i32
    %9 = arith.cmpi eq, %arg2, %c0_i32_8 : i32
    %10 = arith.extui %9 : i1 to i32
    %c0_i32_9 = arith.constant 0 : i32
    %11 = arith.cmpi ne, %10, %c0_i32_9 : i32
    scf.if %11 {
      %c0_10 = arith.constant 0 : index
      %c0_11 = arith.constant 0 : index
      %12 = vector.load %arg7[%c0_10, %c0_11] : memref<16x32xf32, #tpu.memory_space<vmem>>, vector<16x32xf32>
      %c0_12 = arith.constant 0 : index
      %c0_13 = arith.constant 0 : index
      %13 = vector.load %arg5[%c0_12, %c0_13] : memref<1x32xf32, #tpu.memory_space<vmem>>, vector<1x32xf32>
      %14 = vector.broadcast %13 : vector<1x32xf32> to vector<16x32xf32>
      %15 = arith.addf %12, %14 : vector<16x32xf32>
      %c0_14 = arith.constant 0 : index
      %c0_15 = arith.constant 0 : index
      %16 = vector.load %arg6[%c0_14, %c0_15] : memref<16x32xf32, #tpu.memory_space<vmem>>, vector<16x32xf32>
      tpu.vector_store %arg6[%c0_14, %c0_15], %15 {strides = array<i32>} : memref<16x32xf32, #tpu.memory_space<vmem>>, vector<16x32xf32>,
    } else {
    }
    return
  }
  func.func @transform_0(%arg0: i32, %arg1: i32, %arg2: i32) -> (i32, i32) {
    %c0_i32 = arith.constant 0 : i32
    return %arg0, %arg2 : i32, i32
  }
  func.func @transform_1(%arg0: i32, %arg1: i32, %arg2: i32) -> (i32, i32) {
    %c0_i32 = arith.constant 0 : i32
    return %arg1, %arg2 : i32, i32
  }
  func.func @transform_2(%arg0: i32, %arg1: i32, %arg2: i32) -> (i32, i32) {
    %c0_i32 = arith.constant 0 : i32
    %c0_i32_0 = arith.constant 0 : i32
    return %c0_i32, %arg1 : i32, i32
  }
  func.func @transform_3(%arg0: i32, %arg1: i32, %arg2: i32) -> (i32, i32) {
    %c0_i32 = arith.constant 0 : i32
    return %arg0, %arg1 : i32, i32
  }
}

</mosaic_0001>

<llo_original>
// kernel: mha_combined_qkv.5
$region0: #{mha_combined_qkv.5}
  #allocation0 [shape = 'u32[]', space=smem, size = 0x4, offset = 0x4, fixed_abs, tag = 'smem constant byte address 0x4 - core index']
  #allocation1 [shape = 'u32[144,128]{1,0:T(1,128)}', space=vmem, size = 0x12000, scoped, tag = 'internal scratch']
  #allocation2 [shape = 'f32[16,32]{1,0:T(8,128)}', space=vmem, size = 0x2000, scoped, tag = 'scratch operand']
  %s0 = inlined_call_operand.vmem [shape: f32[16,32], index: 0, kind: input, shape index: {}]
  %s1 = inlined_call_operand.vmem [shape: f32[32,32], index: 1, kind: input, shape index: {}]
  %s2 = inlined_call_operand.vmem [shape: f32[1,32], index: 2, kind: input, shape index: {}]
  %s3 = inlined_call_operand.hbm [shape: f32[16,32], index: 3, kind: output, shape index: {}]
  %s4 = sld [smem:[#allocation0]]
  $region30: #{mha_combined_qkv.5} parent=0
    _
  %s6 = ssub.s32 1, %s4
  %s7 = scalar_select 0, %s6, %s4
  $region1: #{mha_combined_qkv.5} parent=0
    #allocation3 [shape = 'u8[8192]{0}', space=vmem, size = 0x2000, scoped, tag = 'output window, operand 0, single buffered']
    #allocation4 [shape = 's32[1]{0}', space=sflag, size = 0x4, scoped, tag = 'scoped memory for mha_combined_qkv.5']
    %8 = vsyncpa [#allocation4], 0
    // Predicated region
    $region2: #{mha_combined_qkv.5} parent=1 // pred_check
      _
    $region3: #{mha_combined_qkv.5} parent=1 // pred_check_branch
      %10 = sbr.rel (0) target = $region5
    $region4: #{mha_combined_qkv.5} parent=1 // pred_region
      _
    $region5: #{mha_combined_qkv.5} parent=1 // pred_fallthru
      _
    // Predicated region
    $region6: #{mha_combined_qkv.5} parent=1 // pred_check
      _
    $region7: #{mha_combined_qkv.5} parent=1 // pred_check_branch
      %12 = sbr.rel (0) target = $region9
    $region8: #{mha_combined_qkv.5} parent=1 // pred_region
      _
    $region9: #{mha_combined_qkv.5} parent=1 // pred_fallthru
      _
    // Predicated region
    $region10: #{mha_combined_qkv.5} parent=1 // pred_check
      _
    $region11: #{mha_combined_qkv.5} parent=1 // pred_check_branch
      %14 = sbr.rel (0) target = $region13
    $region12: #{mha_combined_qkv.5} parent=1 // pred_region
      _
    $region13: #{mha_combined_qkv.5} parent=1 // pred_fallthru
      _
    %p15 = scmp.eq.s32.totalorder 0, 0
    // Predicated region
    $region14: #{mha_combined_qkv.5} parent=1 // pred_check
      %p16 = pneg %p15
    $region15: #{mha_combined_qkv.5} parent=1 // pred_check_branch
      %18 = sbr.rel (%p16) target = $region17
    $region16: #{mha_combined_qkv.5} parent=1 // pred_region
      %vm19 = vcmask 261120
      %20 = vst.msk [vmem:[#allocation2] sm:$0xff] %vm19, 0.0
      %21 = vst.msk [vmem:[#allocation2 + $0x8] sm:$0xff] %vm19, 0.0
    $region17: #{mha_combined_qkv.5} parent=1 // pred_fallthru
      _
    %v22 = vld [vmem:[#allocation2] sm:$0xff]
    %v23 = vld [vmem:[#allocation2 + $0x8] sm:$0xff]
    %v24 = vld [vmem:[%s0] sm:$0xff]
    %v25 = vld [vmem:[%s0 + $0x8] sm:$0xff]
    %v26 = vld [vmem:[%s1] sm:$0xff]
    %v27 = vld [vmem:[%s1 + $0x8] sm:$0xff]
    %v28 = vld [vmem:[%s1 + $0x10] sm:$0xff]
    %v29 = vld [vmem:[%s1 + $0x18] sm:$0xff]
    %vm30 = vcmask 261120
    %v32 = vsel %vm30, %v24, 0
    %v35 = vsel %vm30, %v25, 0
    %v38 = vsel %vm30, %v26, 0
    %v41 = vsel %vm30, %v27, 0
    %v44 = vsel %vm30, %v28, 0
    %v47 = vsel %vm30, %v29, 0
    %49 = vmatprep.subr.mxu0 0.0
    %50 = vmatpush1.xpose.msra.mxu0 %v38
    %51 = vmatprep.subr.mxu0 0.0
    %52 = vmatpush1.xpose.msra.mxu0 %v41
    %53 = vmatprep.subr.mxu0 0.0
    %54 = vmatpush1.xpose.msra.mxu0 %v44
    %55 = vmatprep.subr.mxu0 0.0
    %56 = vmatpush1.xpose.msra.mxu0 %v47
    %57 = vmatprep.subr.mxu0 0.0
    %58 = vmatpush1.xpose.msra.mxu0 0.0
    %59 = vmatprep.subr.mxu0 0.0
    %60 = vmatpush1.xpose.msra.mxu0 0.0
    %61 = vmatprep.subr.mxu0 0.0
    %62 = vmatpush1.xpose.msra.mxu0 0.0
    %63 = vmatprep.subr.mxu0 0.0
    %64 = vmatpush1.xpose.msra.mxu0 0.0
    %65 = vmatprep.subr.mxu0 0.0
    %66 = vmatpush1.xpose.msra.mxu0 0.0
    %67 = vmatprep.subr.mxu0 0.0
    %68 = vmatpush1.xpose.msra.mxu0 0.0
    %69 = vmatprep.subr.mxu0 0.0
    %70 = vmatpush1.xpose.msra.mxu0 0.0
    %71 = vmatprep.subr.mxu0 0.0
    %72 = vmatpush1.xpose.msra.mxu0 0.0
    %73 = vmatprep.subr.mxu0 0.0
    %74 = vmatpush1.xpose.msra.mxu0 0.0
    %75 = vmatprep.subr.mxu0 0.0
    %76 = vmatpush1.xpose.msra.mxu0 0.0
    %77 = vmatprep.subr.mxu0 0.0
    %78 = vmatpush1.xpose.msra.mxu0 0.0
    %79 = vmatprep.subr.mxu0 0.0
    %80 = vmatpush1.xpose.msra.mxu0 0.0
    %81 = vmatprep.subr.mxu0 0.0
    %82 = vmatpush1.xpose.msra.mxu0 0.0
    %83 = vmatprep.subr.mxu0 0.0
    %84 = vmatpush1.xpose.msra.mxu0 0.0
    %85 = vmatprep.subr.mxu0 0.0
    %86 = vmatpush1.xpose.msra.mxu0 0.0
    %87 = vmatprep.subr.mxu0 0.0
    %88 = vmatpush1.xpose.msra.mxu0 0.0
    %89 = vmatprep.subr.mxu0 0.0
    %90 = vmatpush1.xpose.msra.mxu0 0.0
    %91 = vmatprep.subr.mxu0 0.0
    %92 = vmatpush1.xpose.msra.mxu0 0.0
    %93 = vmatprep.subr.mxu0 0.0
    %94 = vmatpush1.xpose.msra.mxu0 0.0
    %95 = vmatprep.subr.mxu0 0.0
    %96 = vmatpush1.xpose.msra.mxu0 0.0
    %97 = vmatprep.subr.mxu0 0.0
    %98 = vmatpush1.xpose.msra.mxu0 0.0
    %99 = vmatprep.subr.mxu0 0.0
    %100 = vmatpush1.xpose.msra.mxu0 0.0
    %101 = vmatprep.subr.mxu0 0.0
    %102 = vmatpush1.xpose.msra.mxu0 0.0
    %103 = vmatprep.subr.mxu0 0.0
    %104 = vmatpush1.xpose.msra.mxu0 0.0
    %105 = vmatprep.subr.mxu0 0.0
    %106 = vmatpush1.xpose.msra.mxu0 0.0
    %107 = vmatprep.subr.mxu0 0.0
    %108 = vmatpush1.xpose.msra.mxu0 0.0
    %109 = vmatprep.subr.mxu0 0.0
    %110 = vmatpush1.xpose.msra.mxu0 0.0
    %111 = vmatprep.subr.mxu0 0.0
    %112 = vmatpush1.xpose.msra.mxu0 0.0
    %113 = vmatprep.mubr.f32.mxu0 0.0
    %114 = vmatmul.mubr.f32.gmra.mrb[0].mxu0 %v32
    %v115 = vpop.f32.mrb[0].mxu0
    %v116 = vadd.f32 0.0, %v115
    %v117 = vpop.f32.mrb[0].mxu0
    %118 = vmatprep.mubr.f32.mxu0 0.0
    %119 = vmatmul.mubr.f32.gmra.mrb[0].mxu0 %v35
    %v120 = vpop.f32.mrb[0].mxu0
    %v121 = vadd.f32 0.0, %v120
    %v122 = vpop.f32.mrb[0].mxu0
    %123 = vdwg.mxu0
    %v124 = vadd.f32 %v22, %v116
    %v125 = vadd.f32 %v23, %v121
    %126 = vst.msk [vmem:[#allocation2] sm:$0xff] %vm30, %v124
    %127 = vst.msk [vmem:[#allocation2 + $0x8] sm:$0xff] %vm30, %v125
    // Predicated region
    $region18: #{mha_combined_qkv.5} parent=1 // pred_check
      %p128 = pneg %p15
    $region19: #{mha_combined_qkv.5} parent=1 // pred_check_branch
      %130 = sbr.rel (%p128) target = $region21
    $region20: #{mha_combined_qkv.5} parent=1 // pred_region
      %v131 = vld [vmem:[#allocation2] sm:$0xff]
      %v132 = vld [vmem:[#allocation2 + $0x8] sm:$0xff]
      %v133 = vld [vmem:[%s2] sm:$0x1]
      %v135 = vlaneseq
      %v136 = vshrl.u32 %v135, 7
      %v137 = vsub.s32 0, %v136
      %v138 = vrot.slane %v133, %v137
      %v140 = vadd.f32 %v131, %v138
      %v141 = vadd.f32 %v132, %v138
      %142 = vst.msk [vmem:[#allocation3] sm:$0xff] %vm30, %v140
      %143 = vst.msk [vmem:[#allocation3 + $0x8] sm:$0xff] %vm30, %v141
    $region21: #{mha_combined_qkv.5} parent=1 // pred_fallthru
      _
    // Predicated region
    $region22: #{mha_combined_qkv.5} parent=1 // pred_check
      _
    $region23: #{mha_combined_qkv.5} parent=1 // pred_check_branch
      %145 = sbr.rel (0) target = $region25
    $region24: #{mha_combined_qkv.5} parent=1 // pred_region
      %s147 = ssub.s32 256, 256
      %148 = vsyncadd [#allocation4], %s147
      %s149 = sshll.u32 [#allocation3], 4
      %s150 = int_to_ptr.vmem [resolvable:$true] %s149
      %155 = dma.vmem_to_hbm [thread:$0]  %s150, 256, %s3, [#allocation4], 128, 128, 8
    $region25: #{mha_combined_qkv.5} parent=1 // pred_fallthru
      _
    // Predicated region
    $region26: #{mha_combined_qkv.5} parent=1 // pred_check
      _
    $region27: #{mha_combined_qkv.5} parent=1 // pred_check_branch
      %157 = sbr.rel (0) target = $region29
    $region28: #{mha_combined_qkv.5} parent=1 // pred_region
      %158 = dma.done [#allocation4], 256
    $region29: #{mha_combined_qkv.5} parent=1 // pred_fallthru
      _
    %159 = vsyncpa [#allocation4], 1

// kernel: mha_combined_qkv.3
$region0: #{mha_combined_qkv.3}
  #allocation0 [shape = 'u32[]', space=smem, size = 0x4, offset = 0x4, fixed_abs, tag = 'smem constant byte address 0x4 - core index']
  #allocation1 [shape = 'u32[144,128]{1,0:T(1,128)}', space=vmem, size = 0x12000, scoped, tag = 'internal scratch']
  #allocation2 [shape = 'f32[16,32]{1,0:T(8,128)}', space=vmem, size = 0x2000, scoped, tag = 'scratch operand']
  %s0 = inlined_call_operand.vmem [shape: f32[16,32], index: 0, kind: input, shape index: {}]
  %s1 = inlined_call_operand.vmem [shape: f32[3,32,32], index: 1, kind: input, shape index: {}]
  %s2 = inlined_call_operand.vmem [shape: f32[3,1,32], index: 2, kind: input, shape index: {}]
  %s3 = inlined_call_operand.vmem [shape: f32[3,16,32], index: 3, kind: output, shape index: {}]
  %s4 = sld [smem:[#allocation0]]
  $region53: #{mha_combined_qkv.3} parent=0
    _
  %s6 = ssub.s32 1, %s4
  %s7 = scalar_select 0, %s6, %s4
  loop: start=0, step=1, limit=5
  $region2: #{mha_combined_qkv.3} parent=0 // loop_pre_header
    _
  $region3: #{mha_combined_qkv.3} parent=0 // loop_header
    %s9 = sphi 0, %s13
    %p10 = scmp.ge.s32.totalorder %s9, 5
    %s16 = sphi 0, %s42
    %s17 = sphi 0, %s38
    %s18 = sphi 0, %s34
    %s19 = sphi 0, %s30
    %s20 = sphi 0, %s16
    %s21 = sphi 0, %s17
    %s22 = sphi 0, %s18
    %s23 = sphi 0, %s19
    %s24 = sphi 0, %s20
    %s25 = sphi 0, %s21
    %s26 = sphi 0, %s22
    %s27 = sphi 0, %s23
    %s47 = sphi 0, %s49
    %s50 = sphi 0, %s47
    %s51 = sphi 0, %s50
    %s67 = sphi 0, %s51
    %s77 = sphi 0, %s79
    %s80 = sphi 0, %s77
    %s81 = sphi 0, %s80
    %s97 = sphi 0, %s81
    %s105 = sphi 0, %s107
    %s108 = sphi 0, %s105
    %s109 = sphi 0, %s108
    %s125 = sphi 0, %s109
    %s135 = sphi 0, %s137
    %s138 = sphi 0, %s135
    %s139 = sphi 0, %s138
    %s155 = sphi 0, %s139
  $region4: #{mha_combined_qkv.3} parent=0 // loop_header_branch
    %12 = sbr.rel (%p10) target = $region8
  $region5: #{mha_combined_qkv.3} parent=0 // loop_body
    %s14 = ssub.s32 %s9, 1
    %s15 = ssub.s32 %s9, 2
    %s28 = sadd.s32 1, %s19
    %p29 = scmp.ge.s32.totalorder %s28, 1
    %s30 = scalar_select %p29, 0, %s28
    %s31 = sadd.s32 1, %s18
    %s32 = scalar_select %p29, %s31, %s18
    %p33 = scmp.ge.s32.totalorder %s32, 1
    %s34 = scalar_select %p33, 0, %s32
    %s35 = sadd.s32 1, %s17
    %s36 = scalar_select %p33, %s35, %s17
    %p37 = scmp.ge.s32.totalorder %s36, 1
    %s38 = scalar_select %p37, 0, %s36
    %s39 = sadd.s32 1, %s16
    %s40 = scalar_select %p37, %s39, %s16
    %p41 = scmp.ge.s32.totalorder %s40, 3
    %s42 = scalar_select %p41, 0, %s40
    %s43 = ssub.s32 %s17, %s38
    %s44 = ssub.s32 %s19, %s30
    %s45 = sor.u32 %s43, %s44
    %p46 = scmp.eq.s32.totalorder %s45, 0
    %s48 = sadd.s32 %s47, 1
    %s49 = scalar_select %p46, %s47, %s48
    %p52 = pneg %p46
    %p53 = scmp.eq.s32.totalorder %s9, 2
    %p54 = por %p52, %p53
    %p55 = scmp.ne.s32.totalorder %s47, %s50
    %p56 = scmp.eq.s32.totalorder %s9, 0
    %p57 = por %p55, %p56
    %p58 = scmp.ne.s32.totalorder %s47, %s50
    %p59 = scmp.eq.s32.totalorder %s14, 2
    %p60 = por %p58, %p59
    %p61 = scmp.ne.s32.totalorder %s50, %s51
    %p62 = scmp.eq.s32.totalorder %s14, 0
    %p63 = por %p61, %p62
    %p64 = scmp.ne.s32.totalorder %s50, %s51
    %p65 = scmp.eq.s32.totalorder %s15, 2
    %p66 = por %p64, %p65
    %p68 = scmp.ne.s32.totalorder %s51, %s67
    %p69 = scmp.eq.s32.totalorder %s15, 0
    %p70 = por %p68, %p69
    %s71 = ssub.s32 %s16, %s42
    %s72 = ssub.s32 %s18, %s34
    %s73 = sor.u32 %s71, %s72
    %s74 = ssub.s32 %s19, %s30
    %s75 = sor.u32 %s73, %s74
    %p76 = scmp.eq.s32.totalorder %s75, 0
    %s78 = sadd.s32 %s77, 1
    %s79 = scalar_select %p76, %s77, %s78
    %p82 = pneg %p76
    %p83 = scmp.eq.s32.totalorder %s9, 2
    %p84 = por %p82, %p83
    %p85 = scmp.ne.s32.totalorder %s77, %s80
    %p86 = scmp.eq.s32.totalorder %s9, 0
    %p87 = por %p85, %p86
    %p88 = scmp.ne.s32.totalorder %s77, %s80
    %p89 = scmp.eq.s32.totalorder %s14, 2
    %p90 = por %p88, %p89
    %p91 = scmp.ne.s32.totalorder %s80, %s81
    %p92 = scmp.eq.s32.totalorder %s14, 0
    %p93 = por %p91, %p92
    %p94 = scmp.ne.s32.totalorder %s80, %s81
    %p95 = scmp.eq.s32.totalorder %s15, 2
    %p96 = por %p94, %p95
    %p98 = scmp.ne.s32.totalorder %s81, %s97
    %p99 = scmp.eq.s32.totalorder %s15, 0
    %p100 = por %p98, %p99
    %s101 = ssub.s32 %s16, %s42
    %s102 = ssub.s32 %s18, %s34
    %s103 = sor.u32 %s101, %s102
    %p104 = scmp.eq.s32.totalorder %s103, 0
    %s106 = sadd.s32 %s105, 1
    %s107 = scalar_select %p104, %s105, %s106
    %p110 = pneg %p104
    %p111 = scmp.eq.s32.totalorder %s9, 2
    %p112 = por %p110, %p111
    %p113 = scmp.ne.s32.totalorder %s105, %s108
    %p114 = scmp.eq.s32.totalorder %s9, 0
    %p115 = por %p113, %p114
    %p116 = scmp.ne.s32.totalorder %s105, %s108
    %p117 = scmp.eq.s32.totalorder %s14, 2
    %p118 = por %p116, %p117
    %p119 = scmp.ne.s32.totalorder %s108, %s109
    %p120 = scmp.eq.s32.totalorder %s14, 0
    %p121 = por %p119, %p120
    %p122 = scmp.ne.s32.totalorder %s108, %s109
    %p123 = scmp.eq.s32.totalorder %s15, 2
    %p124 = por %p122, %p123
    %p126 = scmp.ne.s32.totalorder %s109, %s125
    %p127 = scmp.eq.s32.totalorder %s15, 0
    %p128 = por %p126, %p127
    %s129 = ssub.s32 %s16, %s42
    %s130 = ssub.s32 %s17, %s38
    %s131 = sor.u32 %s129, %s130
    %s132 = ssub.s32 %s18, %s34
    %s133 = sor.u32 %s131, %s132
    %p134 = scmp.eq.s32.totalorder %s133, 0
    %s136 = sadd.s32 %s135, 1
    %s137 = scalar_select %p134, %s135, %s136
    %p140 = pneg %p134
    %p141 = scmp.eq.s32.totalorder %s9, 2
    %p142 = por %p140, %p141
    %p143 = scmp.ne.s32.totalorder %s135, %s138
    %p144 = scmp.eq.s32.totalorder %s9, 0
    %p145 = por %p143, %p144
    %p146 = scmp.ne.s32.totalorder %s135, %s138
    %p147 = scmp.eq.s32.totalorder %s14, 2
    %p148 = por %p146, %p147
    %p149 = scmp.ne.s32.totalorder %s138, %s139
    %p150 = scmp.eq.s32.totalorder %s14, 0
    %p151 = por %p149, %p150
    %p152 = scmp.ne.s32.totalorder %s138, %s139
    %p153 = scmp.eq.s32.totalorder %s15, 2
    %p154 = por %p152, %p153
    %p156 = scmp.ne.s32.totalorder %s139, %s155
    %p157 = scmp.eq.s32.totalorder %s15, 0
    %p158 = por %p156, %p157
    %p159 = scmp.le.s32.totalorder 1, %s9
    %p160 = scmp.lt.s32.totalorder %s9, 4
    %p161 = pnand %p159, %p160
    %p162 = pneg %p161
    // Predicated region
    $region9: #{mha_combined_qkv.3} parent=5 // pred_check
      _
    $region10: #{mha_combined_qkv.3} parent=5 // pred_check_branch
      %164 = sbr.rel (%p161) target = $region12
    $region11: #{mha_combined_qkv.3} parent=5 // pred_region
      %s165 = ssub.s32 %s9, 1
      // Predicated region
      $region13: #{mha_combined_qkv.3} parent=11 // pred_check
        %p166 = pneg %p63
      $region14: #{mha_combined_qkv.3} parent=11 // pred_check_branch
        %168 = sbr.rel (%p166) target = $region16
      $region15: #{mha_combined_qkv.3} parent=11 // pred_region
        %s169 = smul.u32 2, %s21
        %p170 = scmp.lt.s32.totalorder %s169, 1
        %s171 = scalar_select %p170, %s169, 1
        %p172 = scmp.lt.s32.totalorder %s23, 0
        %s173 = scalar_select %p172, %s23, 0
        %s174 = sadd.s32 %s173, %s171
        %s175 = smul.addr %s174, 8
        %s176 = scalar_lea.vmem %s0, %s175
        %s177 = smul.u32 2, %s21
      $region16: #{mha_combined_qkv.3} parent=11 // pred_fallthru
        _
    $region12: #{mha_combined_qkv.3} parent=5 // pred_fallthru
      _
    %p178 = scmp.lt.s32.totalorder %s9, 3
    // Predicated region
    $region17: #{mha_combined_qkv.3} parent=5 // pred_check
      %p179 = pneg %p178
    $region18: #{mha_combined_qkv.3} parent=5 // pred_check_branch
      %181 = sbr.rel (%p179) target = $region20
    $region19: #{mha_combined_qkv.3} parent=5 // pred_region
      // Predicated region
      $region21: #{mha_combined_qkv.3} parent=19 // pred_check
        %p182 = pneg %p87
      $region22: #{mha_combined_qkv.3} parent=19 // pred_check_branch
        %184 = sbr.rel (%p182) target = $region24
      $region23: #{mha_combined_qkv.3} parent=19 // pred_region
        %s185 = smul.u32 4, %s18
        %p186 = scmp.lt.s32.totalorder %s16, 2
        %s187 = scalar_select %p186, %s16, 2
        %p188 = scmp.lt.s32.totalorder %s185, 3
        %s189 = scalar_select %p188, %s185, 3
        %p190 = scmp.lt.s32.totalorder %s19, 0
        %s191 = scalar_select %p190, %s19, 0
        %s192 = sadd.s32 %s191, %s189
        %s193 = smul.addr %s187, 4
        %s194 = sadd.s32 %s192, %s193
        %s195 = smul.addr %s194, 8
        %s196 = scalar_lea.vmem %s1, %s195
        %s197 = smul.u32 4, %s18
      $region24: #{mha_combined_qkv.3} parent=19 // pred_fallthru
        _
      // Predicated region
      $region25: #{mha_combined_qkv.3} parent=19 // pred_check
        %p198 = pneg %p115
      $region26: #{mha_combined_qkv.3} parent=19 // pred_check_branch
        %200 = sbr.rel (%p198) target = $region28
      $region27: #{mha_combined_qkv.3} parent=19 // pred_region
        %p201 = scmp.lt.s32.totalorder %s16, 2
        %s202 = scalar_select %p201, %s16, 2
        %p203 = scmp.lt.s32.totalorder %s18, 0
        %s204 = scalar_select %p203, %s18, 0
        %s205 = sadd.s32 %s204, %s202
        %s206 = scalar_lea.vmem %s2, %s205
      $region28: #{mha_combined_qkv.3} parent=19 // pred_fallthru
        _
    $region20: #{mha_combined_qkv.3} parent=5 // pred_fallthru
      _
    %p207 = scmp.le.s32.totalorder 1, %s9
    %p208 = scmp.lt.s32.totalorder %s9, 4
    %p209 = pnand %p207, %p208
    %p210 = pneg %p209
    // Predicated region
    $region29: #{mha_combined_qkv.3} parent=5 // pred_check
      _
    $region30: #{mha_combined_qkv.3} parent=5 // pred_check_branch
      %212 = sbr.rel (%p209) target = $region32
    $region31: #{mha_combined_qkv.3} parent=5 // pred_region
      %s213 = ssub.s32 %s9, 1
      %s214 = smul.u32 2, %s21
      %p215 = scmp.lt.s32.totalorder %s214, 1
      %s216 = scalar_select %p215, %s214, 1
      %p217 = scmp.lt.s32.totalorder %s23, 0
      %s218 = scalar_select %p217, %s23, 0
      %s219 = sadd.s32 %s218, %s216
      %s220 = smul.addr %s219, 8
      %s221 = scalar_lea.vmem %s0, %s220
      %p222 = pneg %p63
      %p223 = pneg %p60
      %s224 = smul.u32 4, %s22
      %p225 = scmp.lt.s32.totalorder %s20, 2
      %s226 = scalar_select %p225, %s20, 2
      %p227 = scmp.lt.s32.totalorder %s224, 3
      %s228 = scalar_select %p227, %s224, 3
      %p229 = scmp.lt.s32.totalorder %s23, 0
      %s230 = scalar_select %p229, %s23, 0
      %s231 = sadd.s32 %s230, %s228
      %s232 = smul.addr %s226, 4
      %s233 = sadd.s32 %s231, %s232
      %s234 = smul.addr %s233, 8
      %s235 = scalar_lea.vmem %s1, %s234
      %p236 = pneg %p93
      %p237 = pneg %p90
      %p238 = scmp.lt.s32.totalorder %s20, 2
      %s239 = scalar_select %p238, %s20, 2
      %p240 = scmp.lt.s32.totalorder %s22, 0
      %s241 = scalar_select %p240, %s22, 0
      %s242 = sadd.s32 %s241, %s239
      %s243 = scalar_lea.vmem %s2, %s242
      %p244 = pneg %p121
      %p245 = pneg %p118
      %p246 = pneg %p151
      %p247 = pneg %p148
      %s248 = smul.u32 2, %s21
      %p249 = scmp.lt.s32.totalorder %s20, 2
      %s250 = scalar_select %p249, %s20, 2
      %p251 = scmp.lt.s32.totalorder %s248, 1
      %s252 = scalar_select %p251, %s248, 1
      %p253 = scmp.lt.s32.totalorder %s22, 0
      %s254 = scalar_select %p253, %s22, 0
      %s255 = sadd.s32 %s254, %s252
      %s256 = smul.addr %s250, 2
      %s257 = sadd.s32 %s255, %s256
      %s258 = smul.addr %s257, 8
      %s259 = scalar_lea.vmem %s3, %s258
      %s260 = smul.u32 2, %s21
      %p261 = scmp.lt.s32.totalorder %s260, 1
      %s262 = scalar_select %p261, %s260, 1
      %p263 = scmp.lt.s32.totalorder %s23, 0
      %s264 = scalar_select %p263, %s23, 0
      %s265 = sadd.s32 %s264, %s262
      %s266 = smul.addr %s265, 8
      %s267 = scalar_lea.vmem %s0, %s266
      %s268 = smul.u32 2, %s21
      %s269 = smul.u32 4, %s22
      %p270 = scmp.lt.s32.totalorder %s20, 2
      %s271 = scalar_select %p270, %s20, 2
      %p272 = scmp.lt.s32.totalorder %s269, 3
      %s273 = scalar_select %p272, %s269, 3
      %p274 = scmp.lt.s32.totalorder %s23, 0
      %s275 = scalar_select %p274, %s23, 0
      %s276 = sadd.s32 %s275, %s273
      %s277 = smul.addr %s271, 4
      %s278 = sadd.s32 %s276, %s277
      %s279 = smul.addr %s278, 8
      %s280 = scalar_lea.vmem %s1, %s279
      %s281 = smul.u32 4, %s22
      %p282 = scmp.lt.s32.totalorder %s20, 2
      %s283 = scalar_select %p282, %s20, 2
      %p284 = scmp.lt.s32.totalorder %s22, 0
      %s285 = scalar_select %p284, %s22, 0
      %s286 = sadd.s32 %s285, %s283
      %s287 = scalar_lea.vmem %s2, %s286
      %s288 = smul.u32 2, %s21
      %p289 = scmp.lt.s32.totalorder %s20, 2
      %s290 = scalar_select %p289, %s20, 2
      %p291 = scmp.lt.s32.totalorder %s288, 1
      %s292 = scalar_select %p291, %s288, 1
      %p293 = scmp.lt.s32.totalorder %s22, 0
      %s294 = scalar_select %p293, %s22, 0
      %s295 = sadd.s32 %s294, %s292
      %s296 = smul.addr %s290, 2
      %s297 = sadd.s32 %s295, %s296
      %s298 = smul.addr %s297, 8
      %s299 = scalar_lea.vmem %s3, %s298
      %s300 = smul.u32 2, %s21
      %p301 = scmp.eq.s32.totalorder %s23, 0
      // Predicated region
      $region33: #{mha_combined_qkv.3} parent=31 // pred_check
        %p302 = pneg %p301
      $region34: #{mha_combined_qkv.3} parent=31 // pred_check_branch
        %304 = sbr.rel (%p302) target = $region36
      $region35: #{mha_combined_qkv.3} parent=31 // pred_region
        %vm305 = vcmask 261120
        %306 = vst.msk [vmem:[#allocation2] sm:$0xff] %vm305, 0.0
        %307 = vst.msk [vmem:[#allocation2 + $0x8] sm:$0xff] %vm305, 0.0
      $region36: #{mha_combined_qkv.3} parent=31 // pred_fallthru
        _
      %v308 = vld [vmem:[#allocation2] sm:$0xff]
      %v309 = vld [vmem:[#allocation2 + $0x8] sm:$0xff]
      %v310 = vld [vmem:[%s267] sm:$0xff]
      %v311 = vld [vmem:[%s267 + $0x8] sm:$0xff]
      %v312 = vld [vmem:[%s280] sm:$0xff]
      %v313 = vld [vmem:[%s280 + $0x8] sm:$0xff]
      %v314 = vld [vmem:[%s280 + $0x10] sm:$0xff]
      %v315 = vld [vmem:[%s280 + $0x18] sm:$0xff]
      %vm316 = vcmask 261120
      %v318 = vsel %vm316, %v310, 0
      %v321 = vsel %vm316, %v311, 0
      %v324 = vsel %vm316, %v312, 0
      %v327 = vsel %vm316, %v313, 0
      %v330 = vsel %vm316, %v314, 0
      %v333 = vsel %vm316, %v315, 0
      %335 = vmatprep.subr.mxu0 0.0
      %336 = vmatpush1.xpose.msra.mxu0 %v324
      %337 = vmatprep.subr.mxu0 0.0
      %338 = vmatpush1.xpose.msra.mxu0 %v327
      %339 = vmatprep.subr.mxu0 0.0
      %340 = vmatpush1.xpose.msra.mxu0 %v330
      %341 = vmatprep.subr.mxu0 0.0
      %342 = vmatpush1.xpose.msra.mxu0 %v333
      %343 = vmatprep.subr.mxu0 0.0
      %344 = vmatpush1.xpose.msra.mxu0 0.0
      %345 = vmatprep.subr.mxu0 0.0
      %346 = vmatpush1.xpose.msra.mxu0 0.0
      %347 = vmatprep.subr.mxu0 0.0
      %348 = vmatpush1.xpose.msra.mxu0 0.0
      %349 = vmatprep.subr.mxu0 0.0
      %350 = vmatpush1.xpose.msra.mxu0 0.0
      %351 = vmatprep.subr.mxu0 0.0
      %352 = vmatpush1.xpose.msra.mxu0 0.0
      %353 = vmatprep.subr.mxu0 0.0
      %354 = vmatpush1.xpose.msra.mxu0 0.0
      %355 = vmatprep.subr.mxu0 0.0
      %356 = vmatpush1.xpose.msra.mxu0 0.0
      %357 = vmatprep.subr.mxu0 0.0
      %358 = vmatpush1.xpose.msra.mxu0 0.0
      %359 = vmatprep.subr.mxu0 0.0
      %360 = vmatpush1.xpose.msra.mxu0 0.0
      %361 = vmatprep.subr.mxu0 0.0
      %362 = vmatpush1.xpose.msra.mxu0 0.0
      %363 = vmatprep.subr.mxu0 0.0
      %364 = vmatpush1.xpose.msra.mxu0 0.0
      %365 = vmatprep.subr.mxu0 0.0
      %366 = vmatpush1.xpose.msra.mxu0 0.0
      %367 = vmatprep.subr.mxu0 0.0
      %368 = vmatpush1.xpose.msra.mxu0 0.0
      %369 = vmatprep.subr.mxu0 0.0
      %370 = vmatpush1.xpose.msra.mxu0 0.0
      %371 = vmatprep.subr.mxu0 0.0
      %372 = vmatpush1.xpose.msra.mxu0 0.0
      %373 = vmatprep.subr.mxu0 0.0
      %374 = vmatpush1.xpose.msra.mxu0 0.0
      %375 = vmatprep.subr.mxu0 0.0
      %376 = vmatpush1.xpose.msra.mxu0 0.0
      %377 = vmatprep.subr.mxu0 0.0
      %378 = vmatpush1.xpose.msra.mxu0 0.0
      %379 = vmatprep.subr.mxu0 0.0
      %380 = vmatpush1.xpose.msra.mxu0 0.0
      %381 = vmatprep.subr.mxu0 0.0
      %382 = vmatpush1.xpose.msra.mxu0 0.0
      %383 = vmatprep.subr.mxu0 0.0
      %384 = vmatpush1.xpose.msra.mxu0 0.0
      %385 = vmatprep.subr.mxu0 0.0
      %386 = vmatpush1.xpose.msra.mxu0 0.0
      %387 = vmatprep.subr.mxu0 0.0
      %388 = vmatpush1.xpose.msra.mxu0 0.0
      %389 = vmatprep.subr.mxu0 0.0
      %390 = vmatpush1.xpose.msra.mxu0 0.0
      %391 = vmatprep.subr.mxu0 0.0
      %392 = vmatpush1.xpose.msra.mxu0 0.0
      %393 = vmatprep.subr.mxu0 0.0
      %394 = vmatpush1.xpose.msra.mxu0 0.0
      %395 = vmatprep.subr.mxu0 0.0
      %396 = vmatpush1.xpose.msra.mxu0 0.0
      %397 = vmatprep.subr.mxu0 0.0
      %398 = vmatpush1.xpose.msra.mxu0 0.0
      %399 = vmatprep.mubr.f32.mxu0 0.0
      %400 = vmatmul.mubr.f32.gmra.mrb[0].mxu0 %v318
      %v401 = vpop.f32.mrb[0].mxu0
      %v402 = vadd.f32 0.0, %v401
      %v403 = vpop.f32.mrb[0].mxu0
      %404 = vmatprep.mubr.f32.mxu0 0.0
      %405 = vmatmul.mubr.f32.gmra.mrb[0].mxu0 %v321
      %v406 = vpop.f32.mrb[0].mxu0
      %v407 = vadd.f32 0.0, %v406
      %v408 = vpop.f32.mrb[0].mxu0
      %409 = vdwg.mxu0
      %v410 = vadd.f32 %v308, %v402
      %v411 = vadd.f32 %v309, %v407
      %412 = vst.msk [vmem:[#allocation2] sm:$0xff] %vm316, %v410
      %413 = vst.msk [vmem:[#allocation2 + $0x8] sm:$0xff] %vm316, %v411
      // Predicated region
      $region37: #{mha_combined_qkv.3} parent=31 // pred_check
        %p414 = pneg %p301
      $region38: #{mha_combined_qkv.3} parent=31 // pred_check_branch
        %416 = sbr.rel (%p414) target = $region40
      $region39: #{mha_combined_qkv.3} parent=31 // pred_region
        %v417 = vld [vmem:[#allocation2] sm:$0xff]
        %v418 = vld [vmem:[#allocation2 + $0x8] sm:$0xff]
        %v419 = vld [vmem:[%s287] sm:$0x1]
        %v421 = vlaneseq
        %v422 = vshrl.u32 %v421, 7
        %v423 = vsub.s32 0, %v422
        %v424 = vrot.slane %v419, %v423
        %v426 = vadd.f32 %v417, %v424
        %v427 = vadd.f32 %v418, %v424
        %428 = vst.msk [vmem:[%s299] sm:$0xff] %vm316, %v426
        %429 = vst.msk [vmem:[%s299 + $0x8] sm:$0xff] %vm316, %v427
      $region40: #{mha_combined_qkv.3} parent=31 // pred_fallthru
        _
      %s430 = smul.u32 2, %s21
      %p431 = scmp.lt.s32.totalorder %s20, 2
      %s432 = scalar_select %p431, %s20, 2
      %p433 = scmp.lt.s32.totalorder %s430, 1
      %s434 = scalar_select %p433, %s430, 1
      %p435 = scmp.lt.s32.totalorder %s22, 0
      %s436 = scalar_select %p435, %s22, 0
      %s437 = sadd.s32 %s436, %s434
      %s438 = smul.addr %s432, 2
      %s439 = sadd.s32 %s437, %s438
      %s440 = smul.addr %s439, 8
      %s441 = scalar_lea.vmem %s3, %s440
      // Predicated region
      $region41: #{mha_combined_qkv.3} parent=31 // pred_check
        %p442 = pneg %p148
      $region42: #{mha_combined_qkv.3} parent=31 // pred_check_branch
        %444 = sbr.rel (%p442) target = $region44
      $region43: #{mha_combined_qkv.3} parent=31 // pred_region
        %s445 = smul.u32 2, %s21
      $region44: #{mha_combined_qkv.3} parent=31 // pred_fallthru
        _
    $region32: #{mha_combined_qkv.3} parent=5 // pred_fallthru
      _
    %p446 = scmp.le.s32.totalorder 2, %s9
    // Predicated region
    $region45: #{mha_combined_qkv.3} parent=5 // pred_check
      %p447 = pneg %p446
    $region46: #{mha_combined_qkv.3} parent=5 // pred_check_branch
      %449 = sbr.rel (%p447) target = $region48
    $region47: #{mha_combined_qkv.3} parent=5 // pred_region
      %s450 = ssub.s32 %s9, 2
      // Predicated region
      $region49: #{mha_combined_qkv.3} parent=47 // pred_check
        %p451 = pneg %p154
      $region50: #{mha_combined_qkv.3} parent=47 // pred_check_branch
        %453 = sbr.rel (%p451) target = $region52
      $region51: #{mha_combined_qkv.3} parent=47 // pred_region
        %s454 = smul.u32 2, %s25
        %p455 = scmp.lt.s32.totalorder %s24, 2
        %s456 = scalar_select %p455, %s24, 2
        %p457 = scmp.lt.s32.totalorder %s454, 1
        %s458 = scalar_select %p457, %s454, 1
        %p459 = scmp.lt.s32.totalorder %s26, 0
        %s460 = scalar_select %p459, %s26, 0
        %s461 = sadd.s32 %s460, %s458
        %s462 = smul.addr %s456, 2
        %s463 = sadd.s32 %s461, %s462
        %s464 = smul.addr %s463, 8
        %s465 = scalar_lea.vmem %s3, %s464
      $region52: #{mha_combined_qkv.3} parent=47 // pred_fallthru
        _
    $region48: #{mha_combined_qkv.3} parent=5 // pred_fallthru
      _
  $region6: #{mha_combined_qkv.3} parent=0 // loop_footer
    %s13 = sadd.s32 1, %s9
  $region7: #{mha_combined_qkv.3} parent=0 // loop_footer_branch
    %8 = sbr.rel target = $region3
  $region8: #{mha_combined_qkv.3} parent=0 // loop_exit
    _

// kernel: mha_combined_qkv.4
$region0: #{mha_combined_qkv.4}
  #allocation0 [shape = 'u32[]', space=smem, size = 0x4, offset = 0x4, fixed_abs, tag = 'smem constant byte address 0x4 - core index']
  #allocation1 [shape = 'u32[144,128]{1,0:T(1,128)}', space=vmem, size = 0x12000, scoped, tag = 'internal scratch']
  #allocation2 [shape = 'f32[8,4]{1,0:T(8,128)}', space=vmem, size = 0x1000, scoped, tag = 'scratch operand']
  #allocation3 [shape = 'f32[8,4]{1,0:T(8,128)}', space=vmem, size = 0x1000, scoped, tag = 'scratch operand']
  #allocation4 [shape = 'f32[8,32]{1,0:T(8,128)}', space=vmem, size = 0x1000, scoped, tag = 'scratch operand']
  %s0 = inlined_call_operand.vmem [shape: f32[3,16,32], index: 0, kind: input, shape index: {}, may-alias: {0,1,2}]
  %s1 = inlined_call_operand.vmem [shape: f32[3,16,32], index: 1, kind: input, shape index: {}, may-alias: {0,1,2}]
  %s2 = inlined_call_operand.vmem [shape: f32[3,16,32], index: 2, kind: input, shape index: {}, may-alias: {0,1,2}]
  %s3 = inlined_call_operand.vmem [shape: f32[16,32], index: 3, kind: output, shape index: {}]
  %s4 = sld [smem:[#allocation0]]
  $region57: #{mha_combined_qkv.4} parent=0
    _
  %s6 = ssub.s32 1, %s4
  %s7 = scalar_select 0, %s6, %s4
  loop: start=0, step=1, limit=4
  $region2: #{mha_combined_qkv.4} parent=0 // loop_pre_header
    _
  $region3: #{mha_combined_qkv.4} parent=0 // loop_header
    %s9 = sphi 0, %s13
    %p10 = scmp.ge.s32.totalorder %s9, 4
    %s16 = sphi 0, %s35
    %s17 = sphi 0, %s31
    %s18 = sphi 0, %s27
    %s19 = sphi 0, %s16
    %s20 = sphi 0, %s17
    %s21 = sphi 0, %s18
    %s22 = sphi 0, %s19
    %s23 = sphi 0, %s20
    %s24 = sphi 0, %s21
    %s40 = sphi 0, %s42
    %s43 = sphi 0, %s40
    %s44 = sphi 0, %s43
    %s60 = sphi 0, %s44
    %s68 = sphi 0, %s70
    %s71 = sphi 0, %s68
    %s72 = sphi 0, %s71
    %s88 = sphi 0, %s72
    %s96 = sphi 0, %s98
    %s99 = sphi 0, %s96
    %s100 = sphi 0, %s99
    %s116 = sphi 0, %s100
    %s124 = sphi 0, %s126
    %s127 = sphi 0, %s124
    %s128 = sphi 0, %s127
    %s144 = sphi 0, %s128
  $region4: #{mha_combined_qkv.4} parent=0 // loop_header_branch
    %12 = sbr.rel (%p10) target = $region8
  $region5: #{mha_combined_qkv.4} parent=0 // loop_body
    %s14 = ssub.s32 %s9, 1
    %s15 = ssub.s32 %s9, 2
    %s25 = sadd.s32 1, %s18
    %p26 = scmp.ge.s32.totalorder %s25, 1
    %s27 = scalar_select %p26, 0, %s25
    %s28 = sadd.s32 1, %s17
    %s29 = scalar_select %p26, %s28, %s17
    %p30 = scmp.ge.s32.totalorder %s29, 1
    %s31 = scalar_select %p30, 0, %s29
    %s32 = sadd.s32 1, %s16
    %s33 = scalar_select %p30, %s32, %s16
    %p34 = scmp.ge.s32.totalorder %s33, 2
    %s35 = scalar_select %p34, 0, %s33
    %s36 = sadd.s32 %s16, %s17
    %s37 = sadd.s32 %s35, %s31
    %s38 = ssub.s32 %s36, %s37
    %p39 = scmp.eq.s32.totalorder %s38, 0
    %s41 = sadd.s32 %s40, 1
    %s42 = scalar_select %p39, %s40, %s41
    %p45 = pneg %p39
    %p46 = scmp.eq.s32.totalorder %s9, 1
    %p47 = por %p45, %p46
    %p48 = scmp.ne.s32.totalorder %s40, %s43
    %p49 = scmp.eq.s32.totalorder %s9, 0
    %p50 = por %p48, %p49
    %p51 = scmp.ne.s32.totalorder %s40, %s43
    %p52 = scmp.eq.s32.totalorder %s14, 1
    %p53 = por %p51, %p52
    %p54 = scmp.ne.s32.totalorder %s43, %s44
    %p55 = scmp.eq.s32.totalorder %s14, 0
    %p56 = por %p54, %p55
    %p57 = scmp.ne.s32.totalorder %s43, %s44
    %p58 = scmp.eq.s32.totalorder %s15, 1
    %p59 = por %p57, %p58
    %p61 = scmp.ne.s32.totalorder %s44, %s60
    %p62 = scmp.eq.s32.totalorder %s15, 0
    %p63 = por %p61, %p62
    %s64 = sadd.s32 %s16, %s18
    %s65 = sadd.s32 %s35, %s27
    %s66 = ssub.s32 %s64, %s65
    %p67 = scmp.eq.s32.totalorder %s66, 0
    %s69 = sadd.s32 %s68, 1
    %s70 = scalar_select %p67, %s68, %s69
    %p73 = pneg %p67
    %p74 = scmp.eq.s32.totalorder %s9, 1
    %p75 = por %p73, %p74
    %p76 = scmp.ne.s32.totalorder %s68, %s71
    %p77 = scmp.eq.s32.totalorder %s9, 0
    %p78 = por %p76, %p77
    %p79 = scmp.ne.s32.totalorder %s68, %s71
    %p80 = scmp.eq.s32.totalorder %s14, 1
    %p81 = por %p79, %p80
    %p82 = scmp.ne.s32.totalorder %s71, %s72
    %p83 = scmp.eq.s32.totalorder %s14, 0
    %p84 = por %p82, %p83
    %p85 = scmp.ne.s32.totalorder %s71, %s72
    %p86 = scmp.eq.s32.totalorder %s15, 1
    %p87 = por %p85, %p86
    %p89 = scmp.ne.s32.totalorder %s72, %s88
    %p90 = scmp.eq.s32.totalorder %s15, 0
    %p91 = por %p89, %p90
    %s92 = sadd.s32 %s16, %s18
    %s93 = sadd.s32 %s35, %s27
    %s94 = ssub.s32 %s92, %s93
    %p95 = scmp.eq.s32.totalorder %s94, 0
    %s97 = sadd.s32 %s96, 1
    %s98 = scalar_select %p95, %s96, %s97
    %p101 = pneg %p95
    %p102 = scmp.eq.s32.totalorder %s9, 1
    %p103 = por %p101, %p102
    %p104 = scmp.ne.s32.totalorder %s96, %s99
    %p105 = scmp.eq.s32.totalorder %s9, 0
    %p106 = por %p104, %p105
    %p107 = scmp.ne.s32.totalorder %s96, %s99
    %p108 = scmp.eq.s32.totalorder %s14, 1
    %p109 = por %p107, %p108
    %p110 = scmp.ne.s32.totalorder %s99, %s100
    %p111 = scmp.eq.s32.totalorder %s14, 0
    %p112 = por %p110, %p111
    %p113 = scmp.ne.s32.totalorder %s99, %s100
    %p114 = scmp.eq.s32.totalorder %s15, 1
    %p115 = por %p113, %p114
    %p117 = scmp.ne.s32.totalorder %s100, %s116
    %p118 = scmp.eq.s32.totalorder %s15, 0
    %p119 = por %p117, %p118
    %s120 = sadd.s32 %s16, %s17
    %s121 = sadd.s32 %s35, %s31
    %s122 = ssub.s32 %s120, %s121
    %p123 = scmp.eq.s32.totalorder %s122, 0
    %s125 = sadd.s32 %s124, 1
    %s126 = scalar_select %p123, %s124, %s125
    %p129 = pneg %p123
    %p130 = scmp.eq.s32.totalorder %s9, 1
    %p131 = por %p129, %p130
    %p132 = scmp.ne.s32.totalorder %s124, %s127
    %p133 = scmp.eq.s32.totalorder %s9, 0
    %p134 = por %p132, %p133
    %p135 = scmp.ne.s32.totalorder %s124, %s127
    %p136 = scmp.eq.s32.totalorder %s14, 1
    %p137 = por %p135, %p136
    %p138 = scmp.ne.s32.totalorder %s127, %s128
    %p139 = scmp.eq.s32.totalorder %s14, 0
    %p140 = por %p138, %p139
    %p141 = scmp.ne.s32.totalorder %s127, %s128
    %p142 = scmp.eq.s32.totalorder %s15, 1
    %p143 = por %p141, %p142
    %p145 = scmp.ne.s32.totalorder %s128, %s144
    %p146 = scmp.eq.s32.totalorder %s15, 0
    %p147 = por %p145, %p146
    %p148 = scmp.le.s32.totalorder 1, %s9
    %p149 = scmp.lt.s32.totalorder %s9, 3
    %p150 = pnand %p148, %p149
    %p151 = pneg %p150
    // Predicated region
    $region9: #{mha_combined_qkv.4} parent=5 // pred_check
      _
    $region10: #{mha_combined_qkv.4} parent=5 // pred_check_branch
      %153 = sbr.rel (%p150) target = $region12
    $region11: #{mha_combined_qkv.4} parent=5 // pred_region
      %s154 = ssub.s32 %s9, 1
    $region12: #{mha_combined_qkv.4} parent=5 // pred_fallthru
      _
    %p155 = scmp.lt.s32.totalorder %s9, 2
    // Predicated region
    $region13: #{mha_combined_qkv.4} parent=5 // pred_check
      %p156 = pneg %p155
    $region14: #{mha_combined_qkv.4} parent=5 // pred_check_branch
      %158 = sbr.rel (%p156) target = $region16
    $region15: #{mha_combined_qkv.4} parent=5 // pred_region
      // Predicated region
      $region17: #{mha_combined_qkv.4} parent=15 // pred_check
        %p159 = pneg %p50
      $region18: #{mha_combined_qkv.4} parent=15 // pred_check_branch
        %161 = sbr.rel (%p159) target = $region20
      $region19: #{mha_combined_qkv.4} parent=15 // pred_region
        %s162 = sadd.s32 %s16, %s17
        %p163 = scmp.lt.s32.totalorder %s162, 1
        %s164 = scalar_select %p163, %s162, 1
        %s165 = smul.addr %s164, 8
        %s166 = scalar_lea.vmem %s0, %s165
        %s167 = sadd.s32 %s16, %s17
      $region20: #{mha_combined_qkv.4} parent=15 // pred_fallthru
        _
      // Predicated region
      $region21: #{mha_combined_qkv.4} parent=15 // pred_check
        %p168 = pneg %p78
      $region22: #{mha_combined_qkv.4} parent=15 // pred_check_branch
        %170 = sbr.rel (%p168) target = $region24
      $region23: #{mha_combined_qkv.4} parent=15 // pred_region
        %s171 = sadd.s32 %s16, %s18
        %p172 = scmp.lt.s32.totalorder %s171, 1
        %s173 = scalar_select %p172, %s171, 1
        %s174 = sadd.s32 %s173, 2
        %s175 = smul.addr %s174, 8
        %s176 = scalar_lea.vmem %s1, %s175
        %s177 = sadd.s32 %s16, %s18
      $region24: #{mha_combined_qkv.4} parent=15 // pred_fallthru
        _
      // Predicated region
      $region25: #{mha_combined_qkv.4} parent=15 // pred_check
        %p178 = pneg %p106
      $region26: #{mha_combined_qkv.4} parent=15 // pred_check_branch
        %180 = sbr.rel (%p178) target = $region28
      $region27: #{mha_combined_qkv.4} parent=15 // pred_region
        %s181 = sadd.s32 %s16, %s18
        %p182 = scmp.lt.s32.totalorder %s181, 1
        %s183 = scalar_select %p182, %s181, 1
        %s184 = sadd.s32 %s183, 4
        %s185 = smul.addr %s184, 8
        %s186 = scalar_lea.vmem %s2, %s185
        %s187 = sadd.s32 %s16, %s18
      $region28: #{mha_combined_qkv.4} parent=15 // pred_fallthru
        _
    $region16: #{mha_combined_qkv.4} parent=5 // pred_fallthru
      _
    %p188 = scmp.le.s32.totalorder 1, %s9
    %p189 = scmp.lt.s32.totalorder %s9, 3
    %p190 = pnand %p188, %p189
    %p191 = pneg %p190
    // Predicated region
    $region29: #{mha_combined_qkv.4} parent=5 // pred_check
      _
    $region30: #{mha_combined_qkv.4} parent=5 // pred_check_branch
      %193 = sbr.rel (%p190) target = $region32
    $region31: #{mha_combined_qkv.4} parent=5 // pred_region
      %s194 = ssub.s32 %s9, 1
      %s195 = sadd.s32 %s19, %s20
      %p196 = scmp.lt.s32.totalorder %s195, 1
      %s197 = scalar_select %p196, %s195, 1
      %s198 = smul.addr %s197, 8
      %s199 = scalar_lea.vmem %s0, %s198
      %p200 = pneg %p56
      %p201 = pneg %p53
      %s202 = sadd.s32 %s19, %s21
      %p203 = scmp.lt.s32.totalorder %s202, 1
      %s204 = scalar_select %p203, %s202, 1
      %s205 = sadd.s32 %s204, 2
      %s206 = smul.addr %s205, 8
      %s207 = scalar_lea.vmem %s1, %s206
      %p208 = pneg %p84
      %p209 = pneg %p81
      %s210 = sadd.s32 %s19, %s21
      %p211 = scmp.lt.s32.totalorder %s210, 1
      %s212 = scalar_select %p211, %s210, 1
      %s213 = sadd.s32 %s212, 4
      %s214 = smul.addr %s213, 8
      %s215 = scalar_lea.vmem %s2, %s214
      %p216 = pneg %p112
      %p217 = pneg %p109
      %p218 = pneg %p140
      %p219 = pneg %p137
      %s220 = sadd.s32 %s19, %s20
      %p221 = scmp.lt.s32.totalorder %s220, 1
      %s222 = scalar_select %p221, %s220, 1
      %s223 = smul.addr %s222, 8
      %s224 = scalar_lea.vmem %s3, %s223
      %s225 = sadd.s32 %s19, %s20
      %p226 = scmp.lt.s32.totalorder %s225, 1
      %s227 = scalar_select %p226, %s225, 1
      %s228 = smul.addr %s227, 8
      %s229 = scalar_lea.vmem %s0, %s228
      %s230 = sadd.s32 %s19, %s20
      %s231 = sadd.s32 %s19, %s21
      %p232 = scmp.lt.s32.totalorder %s231, 1
      %s233 = scalar_select %p232, %s231, 1
      %s234 = sadd.s32 %s233, 2
      %s235 = smul.addr %s234, 8
      %s236 = scalar_lea.vmem %s1, %s235
      %s237 = sadd.s32 %s19, %s21
      %s238 = sadd.s32 %s19, %s21
      %p239 = scmp.lt.s32.totalorder %s238, 1
      %s240 = scalar_select %p239, %s238, 1
      %s241 = sadd.s32 %s240, 4
      %s242 = smul.addr %s241, 8
      %s243 = scalar_lea.vmem %s2, %s242
      %s244 = sadd.s32 %s19, %s21
      %s245 = sadd.s32 %s19, %s20
      %p246 = scmp.lt.s32.totalorder %s245, 1
      %s247 = scalar_select %p246, %s245, 1
      %s248 = smul.addr %s247, 8
      %s249 = scalar_lea.vmem %s3, %s248
      %s250 = sadd.s32 %s19, %s20
      %p251 = scmp.eq.s32.totalorder %s21, 0
      // Predicated region
      $region33: #{mha_combined_qkv.4} parent=31 // pred_check
        %p252 = pneg %p251
      $region34: #{mha_combined_qkv.4} parent=31 // pred_check_branch
        %254 = sbr.rel (%p252) target = $region36
      $region35: #{mha_combined_qkv.4} parent=31 // pred_region
        %vm255 = vcmask 31744
        %256 = vst.msk [vmem:[#allocation2] sm:$0xff] %vm255, -1e+30
        %257 = vst.msk [vmem:[#allocation3] sm:$0xff] %vm255, 0.0
        %vm258 = vcmask 261120
        %259 = vst.msk [vmem:[#allocation4] sm:$0xff] %vm258, 0.0
      $region36: #{mha_combined_qkv.4} parent=31 // pred_fallthru
        _
      %s260 = smul.u32 %s21, 8
      %s261 = sadd.s32 %s20, 1
      %s262 = smul.u32 %s261, 8
      %p263 = scmp.lt.s32.totalorder %s260, %s262
      // Predicated region
      $region37: #{mha_combined_qkv.4} parent=31 // pred_check
        %p264 = pneg %p263
      $region38: #{mha_combined_qkv.4} parent=31 // pred_check_branch
        %266 = sbr.rel (%p264) target = $region40
      $region39: #{mha_combined_qkv.4} parent=31 // pred_region
        %v267 = vld [vmem:[%s229] sm:$0xff]
        %v268 = vld [vmem:[%s236] sm:$0xff]
        %v269 = vld [vmem:[%s243] sm:$0xff]
        %s270 = smul.u32 %s20, 8
        %v271 = vlaneseq
        %v272 = vshrl.u32 %v271, 7
        %v273 = vstv %s270
        %v274 = vadd.s32 %v273, %v272
        %v275 = vlaneseq
        %v276 = vand.u32 %v275, 127
        %v277 = vstv %s260
        %v278 = vadd.s32 %v277, %v276
        %vm279 = vcmp.gt.s32.totalorder %v278, %v274
        %vm280 = vcmask 64512
        %v282 = vsel %vm280, %v267, 0
        %v285 = vsel %vm280, %v268, 0
        %287 = vmatprep.subr.mxu0 0.0
        %288 = vmatpush1.xpose.msra.mxu0 %v285
        %289 = vmatprep.subr.mxu0 0.0
        %290 = vmatpush1.xpose.msra.mxu0 0.0
        %291 = vmatprep.subr.mxu0 0.0
        %292 = vmatpush1.xpose.msra.mxu0 0.0
        %293 = vmatprep.subr.mxu0 0.0
        %294 = vmatpush1.xpose.msra.mxu0 0.0
        %295 = vmatprep.subr.mxu0 0.0
        %296 = vmatpush1.xpose.msra.mxu0 0.0
        %297 = vmatprep.subr.mxu0 0.0
        %298 = vmatpush1.xpose.msra.mxu0 0.0
        %299 = vmatprep.subr.mxu0 0.0
        %300 = vmatpush1.xpose.msra.mxu0 0.0
        %301 = vmatprep.subr.mxu0 0.0
        %302 = vmatpush1.xpose.msra.mxu0 0.0
        %303 = vmatprep.subr.mxu0 0.0
        %304 = vmatpush1.xpose.msra.mxu0 0.0
        %305 = vmatprep.subr.mxu0 0.0
        %306 = vmatpush1.xpose.msra.mxu0 0.0
        %307 = vmatprep.subr.mxu0 0.0
        %308 = vmatpush1.xpose.msra.mxu0 0.0
        %309 = vmatprep.subr.mxu0 0.0
        %310 = vmatpush1.xpose.msra.mxu0 0.0
        %311 = vmatprep.subr.mxu0 0.0
        %312 = vmatpush1.xpose.msra.mxu0 0.0
        %313 = vmatprep.subr.mxu0 0.0
        %314 = vmatpush1.xpose.msra.mxu0 0.0
        %315 = vmatprep.subr.mxu0 0.0
        %316 = vmatpush1.xpose.msra.mxu0 0.0
        %317 = vmatprep.subr.mxu0 0.0
        %318 = vmatpush1.xpose.msra.mxu0 0.0
        %319 = vmatprep.subr.mxu0 0.0
        %320 = vmatpush1.xpose.msra.mxu0 0.0
        %321 = vmatprep.subr.mxu0 0.0
        %322 = vmatpush1.xpose.msra.mxu0 0.0
        %323 = vmatprep.subr.mxu0 0.0
        %324 = vmatpush1.xpose.msra.mxu0 0.0
        %325 = vmatprep.subr.mxu0 0.0
        %326 = vmatpush1.xpose.msra.mxu0 0.0
        %327 = vmatprep.subr.mxu0 0.0
        %328 = vmatpush1.xpose.msra.mxu0 0.0
        %329 = vmatprep.subr.mxu0 0.0
        %330 = vmatpush1.xpose.msra.mxu0 0.0
        %331 = vmatprep.subr.mxu0 0.0
        %332 = vmatpush1.xpose.msra.mxu0 0.0
        %333 = vmatprep.subr.mxu0 0.0
        %334 = vmatpush1.xpose.msra.mxu0 0.0
        %335 = vmatprep.subr.mxu0 0.0
        %336 = vmatpush1.xpose.msra.mxu0 0.0
        %337 = vmatprep.subr.mxu0 0.0
        %338 = vmatpush1.xpose.msra.mxu0 0.0
        %339 = vmatprep.subr.mxu0 0.0
        %340 = vmatpush1.xpose.msra.mxu0 0.0
        %341 = vmatprep.subr.mxu0 0.0
        %342 = vmatpush1.xpose.msra.mxu0 0.0
        %343 = vmatprep.subr.mxu0 0.0
        %344 = vmatpush1.xpose.msra.mxu0 0.0
        %345 = vmatprep.subr.mxu0 0.0
        %346 = vmatpush1.xpose.msra.mxu0 0.0
        %347 = vmatprep.subr.mxu0 0.0
        %348 = vmatpush1.xpose.msra.mxu0 0.0
        %349 = vmatprep.subr.mxu0 0.0
        %350 = vmatpush1.xpose.msra.mxu0 0.0
        %351 = vmatprep.mubr.f32.mxu0 0.0
        %352 = vmatmul.mubr.f32.gmra.mrb[0].mxu0 %v282
        %v353 = vpop.f32.mrb[0].mxu0
        %v354 = vadd.f32 0.0, %v353
        %v355 = vpop.f32.mrb[0].mxu0
        %356 = vdwg.mxu0
        %v357 = vmul.f32 %v354, 2.828427
        %v358 = vsel %vm279, -1e+30, %v357
        %v359 = vld [vmem:[#allocation2] sm:$0xff]
        %v360 = vsel %vm280, %v358, -inf
        %361 = vmax.xlane.f32.xlu0 %v360
        %v362 = vpop.xlane.xlu0 %361
        %v363 = vmax.f32 %v359, %v362
        %v364 = vsub.f32 %v359, %v363
        %v365 = vmul.f32 %v364, 1.442695
        %v366 = vpow.pop %v365
        %368 = vset.pattern.permute.xlu0 0
        %369 = vperm.xlu0 %368, %v363
        %v370 = vpop.permute.xlu0 %369
        %v372 = vsub.f32 %v358, %v370
        %v373 = vmul.f32 %v372, 1.442695
        %v374 = vpow.pop %v373
        %v375 = vld [vmem:[#allocation3] sm:$0xff]
        %v376 = vmul.f32 %v366, %v375
        %v377 = vsel %vm280, %v374, 0.0
        %378 = vadd.xlane.f32.xlu0 %v377
        %v379 = vpop.xlane.xlu0 %378
        %v380 = vadd.f32 %v376, %v379
        %vm381 = vcmask 7168
        %382 = vst.msk [vmem:[#allocation3] sm:$0xff] %vm381, %v380
        %v383 = vld [vmem:[#allocation4] sm:$0xff]
        %385 = vset.pattern.permute.xlu0 0
        %386 = vperm.xlu0 %385, %v366
        %v387 = vpop.permute.xlu0 %386
        %v389 = vmul.f32 %v387, %v383
        %v391 = vsel %vm280, %v374, 0
        %393 = vmatprep.subr.mxu0 0.0
        %394 = vmatpush1.msra.mxu0 %v269
        %395 = vmatprep.subr.mxu0 0.0
        %396 = vmatpush1.msra.mxu0 0.0
        %397 = vmatprep.subr.mxu0 0.0
        %398 = vmatpush1.msra.mxu0 0.0
        %399 = vmatprep.subr.mxu0 0.0
        %400 = vmatpush1.msra.mxu0 0.0
        %401 = vmatprep.subr.mxu0 0.0
        %402 = vmatpush1.msra.mxu0 0.0
        %403 = vmatprep.subr.mxu0 0.0
        %404 = vmatpush1.msra.mxu0 0.0
        %405 = vmatprep.subr.mxu0 0.0
        %406 = vmatpush1.msra.mxu0 0.0
        %407 = vmatprep.subr.mxu0 0.0
        %408 = vmatpush1.msra.mxu0 0.0
        %409 = vmatprep.subr.mxu0 0.0
        %410 = vmatpush1.msra.mxu0 0.0
        %411 = vmatprep.subr.mxu0 0.0
        %412 = vmatpush1.msra.mxu0 0.0
        %413 = vmatprep.subr.mxu0 0.0
        %414 = vmatpush1.msra.mxu0 0.0
        %415 = vmatprep.subr.mxu0 0.0
        %416 = vmatpush1.msra.mxu0 0.0
        %417 = vmatprep.subr.mxu0 0.0
        %418 = vmatpush1.msra.mxu0 0.0
        %419 = vmatprep.subr.mxu0 0.0
        %420 = vmatpush1.msra.mxu0 0.0
        %421 = vmatprep.subr.mxu0 0.0
        %422 = vmatpush1.msra.mxu0 0.0
        %423 = vmatprep.subr.mxu0 0.0
        %424 = vmatpush1.msra.mxu0 0.0
        %425 = vmatprep.subr.mxu0 0.0
        %426 = vmatpush1.msra.mxu0 0.0
        %427 = vmatprep.subr.mxu0 0.0
        %428 = vmatpush1.msra.mxu0 0.0
        %429 = vmatprep.subr.mxu0 0.0
        %430 = vmatpush1.msra.mxu0 0.0
        %431 = vmatprep.subr.mxu0 0.0
        %432 = vmatpush1.msra.mxu0 0.0
        %433 = vmatprep.subr.mxu0 0.0
        %434 = vmatpush1.msra.mxu0 0.0
        %435 = vmatprep.subr.mxu0 0.0
        %436 = vmatpush1.msra.mxu0 0.0
        %437 = vmatprep.subr.mxu0 0.0
        %438 = vmatpush1.msra.mxu0 0.0
        %439 = vmatprep.subr.mxu0 0.0
        %440 = vmatpush1.msra.mxu0 0.0
        %441 = vmatprep.subr.mxu0 0.0
        %442 = vmatpush1.msra.mxu0 0.0
        %443 = vmatprep.subr.mxu0 0.0
        %444 = vmatpush1.msra.mxu0 0.0
        %445 = vmatprep.subr.mxu0 0.0
        %446 = vmatpush1.msra.mxu0 0.0
        %447 = vmatprep.subr.mxu0 0.0
        %448 = vmatpush1.msra.mxu0 0.0
        %449 = vmatprep.subr.mxu0 0.0
        %450 = vmatpush1.msra.mxu0 0.0
        %451 = vmatprep.subr.mxu0 0.0
        %452 = vmatpush1.msra.mxu0 0.0
        %453 = vmatprep.subr.mxu0 0.0
        %454 = vmatpush1.msra.mxu0 0.0
        %455 = vmatprep.subr.mxu0 0.0
        %456 = vmatpush1.msra.mxu0 0.0
        %457 = vmatprep.mubr.f32.mxu0 0.0
        %458 = vmatmul.mubr.f32.gmra.mrb[0].mxu0 %v391
        %v459 = vpop.f32.mrb[0].mxu0
        %v460 = vadd.f32 0.0, %v459
        %v461 = vpop.f32.mrb[0].mxu0
        %462 = vdwg.mxu0
        %v463 = vadd.f32 %v389, %v460
        %464 = vst.msk [vmem:[#allocation4] sm:$0xff] %vm280, %v463
        %465 = vst.msk [vmem:[#allocation2] sm:$0xff] %vm381, %v363
        %466 = vrot.lane.b32.xlu0 %v267, 120
        %v467 = vpop.permute.xlu0 %466
        %468 = vrot.lane.b32.xlu0 %v268, 120
        %v469 = vpop.permute.xlu0 %468
        %v470 = vsel %vm280, %v467, 0
        %v472 = vsel %vm280, %v469, 0
        %474 = vmatprep.subr.mxu0 0.0
        %475 = vmatpush1.xpose.msra.mxu0 %v472
        %476 = vmatprep.subr.mxu0 0.0
        %477 = vmatpush1.xpose.msra.mxu0 0.0
        %478 = vmatprep.subr.mxu0 0.0
        %479 = vmatpush1.xpose.msra.mxu0 0.0
        %480 = vmatprep.subr.mxu0 0.0
        %481 = vmatpush1.xpose.msra.mxu0 0.0
        %482 = vmatprep.subr.mxu0 0.0
        %483 = vmatpush1.xpose.msra.mxu0 0.0
        %484 = vmatprep.subr.mxu0 0.0
        %485 = vmatpush1.xpose.msra.mxu0 0.0
        %486 = vmatprep.subr.mxu0 0.0
        %487 = vmatpush1.xpose.msra.mxu0 0.0
        %488 = vmatprep.subr.mxu0 0.0
        %489 = vmatpush1.xpose.msra.mxu0 0.0
        %490 = vmatprep.subr.mxu0 0.0
        %491 = vmatpush1.xpose.msra.mxu0 0.0
        %492 = vmatprep.subr.mxu0 0.0
        %493 = vmatpush1.xpose.msra.mxu0 0.0
        %494 = vmatprep.subr.mxu0 0.0
        %495 = vmatpush1.xpose.msra.mxu0 0.0
        %496 = vmatprep.subr.mxu0 0.0
        %497 = vmatpush1.xpose.msra.mxu0 0.0
        %498 = vmatprep.subr.mxu0 0.0
        %499 = vmatpush1.xpose.msra.mxu0 0.0
        %500 = vmatprep.subr.mxu0 0.0
        %501 = vmatpush1.xpose.msra.mxu0 0.0
        %502 = vmatprep.subr.mxu0 0.0
        %503 = vmatpush1.xpose.msra.mxu0 0.0
        %504 = vmatprep.subr.mxu0 0.0
        %505 = vmatpush1.xpose.msra.mxu0 0.0
        %506 = vmatprep.subr.mxu0 0.0
        %507 = vmatpush1.xpose.msra.mxu0 0.0
        %508 = vmatprep.subr.mxu0 0.0
        %509 = vmatpush1.xpose.msra.mxu0 0.0
        %510 = vmatprep.subr.mxu0 0.0
        %511 = vmatpush1.xpose.msra.mxu0 0.0
        %512 = vmatprep.subr.mxu0 0.0
        %513 = vmatpush1.xpose.msra.mxu0 0.0
        %514 = vmatprep.subr.mxu0 0.0
        %515 = vmatpush1.xpose.msra.mxu0 0.0
        %516 = vmatprep.subr.mxu0 0.0
        %517 = vmatpush1.xpose.msra.mxu0 0.0
        %518 = vmatprep.subr.mxu0 0.0
        %519 = vmatpush1.xpose.msra.mxu0 0.0
        %520 = vmatprep.subr.mxu0 0.0
        %521 = vmatpush1.xpose.msra.mxu0 0.0
        %522 = vmatprep.subr.mxu0 0.0
        %523 = vmatpush1.xpose.msra.mxu0 0.0
        %524 = vmatprep.subr.mxu0 0.0
        %525 = vmatpush1.xpose.msra.mxu0 0.0
        %526 = vmatprep.subr.mxu0 0.0
        %527 = vmatpush1.xpose.msra.mxu0 0.0
        %528 = vmatprep.subr.mxu0 0.0
        %529 = vmatpush1.xpose.msra.mxu0 0.0
        %530 = vmatprep.subr.mxu0 0.0
        %531 = vmatpush1.xpose.msra.mxu0 0.0
        %532 = vmatprep.subr.mxu0 0.0
        %533 = vmatpush1.xpose.msra.mxu0 0.0
        %534 = vmatprep.subr.mxu0 0.0
        %535 = vmatpush1.xpose.msra.mxu0 0.0
        %536 = vmatprep.subr.mxu0 0.0
        %537 = vmatpush1.xpose.msra.mxu0 0.0
        %538 = vmatprep.mubr.f32.mxu0 0.0
        %539 = vmatmul.mubr.f32.gmra.mrb[0].mxu0 %v470
        %v540 = vpop.f32.mrb[0].mxu0
        %v541 = vadd.f32 0.0, %v540
        %v542 = vpop.f32.mrb[0].mxu0
        %543 = vdwg.mxu0
        %v544 = vmul.f32 %v541, 2.828427
        %v545 = vsel %vm279, -1e+30, %v544
        %v546 = vld [vmem:[#allocation2] sm:$0xff]
        %v547 = vsel %vm280, %v545, -inf
        %548 = vmax.xlane.f32.xlu0 %v547
        %v549 = vpop.xlane.xlu0 %548
        %v550 = vmax.f32 %v546, %v549
        %v551 = vsub.f32 %v546, %v550
        %v552 = vmul.f32 %v551, 1.442695
        %v553 = vpow.pop %v552
        %555 = vset.pattern.permute.xlu0 1
        %556 = vperm.xlu0 %555, %v550
        %v557 = vpop.permute.xlu0 %556
        %v559 = vsub.f32 %v545, %v557
        %v560 = vmul.f32 %v559, 1.442695
        %v561 = vpow.pop %v560
        %v562 = vld [vmem:[#allocation3] sm:$0xff]
        %v563 = vmul.f32 %v553, %v562
        %v564 = vsel %vm280, %v561, 0.0
        %565 = vadd.xlane.f32.xlu0 %v564
        %v566 = vpop.xlane.xlu0 %565
        %v567 = vadd.f32 %v563, %v566
        %vm568 = vcmask 15368
        %569 = vst.msk [vmem:[#allocation3] sm:$0xff] %vm568, %v567
        %v570 = vld [vmem:[#allocation4] sm:$0xff]
        %572 = vset.pattern.permute.xlu0 1
        %573 = vperm.xlu0 %572, %v553
        %v574 = vpop.permute.xlu0 %573
        %v576 = vmul.f32 %v574, %v570
        %578 = vrot.lane.b32.xlu0 %v269, 120
        %v579 = vpop.permute.xlu0 %578
        %v582 = vsel %vm280, %v561, 0
        %584 = vmatprep.subr.mxu0 0.0
        %585 = vmatpush1.msra.mxu0 %v579
        %586 = vmatprep.subr.mxu0 0.0
        %587 = vmatpush1.msra.mxu0 0.0
        %588 = vmatprep.subr.mxu0 0.0
        %589 = vmatpush1.msra.mxu0 0.0
        %590 = vmatprep.subr.mxu0 0.0
        %591 = vmatpush1.msra.mxu0 0.0
        %592 = vmatprep.subr.mxu0 0.0
        %593 = vmatpush1.msra.mxu0 0.0
        %594 = vmatprep.subr.mxu0 0.0
        %595 = vmatpush1.msra.mxu0 0.0
        %596 = vmatprep.subr.mxu0 0.0
        %597 = vmatpush1.msra.mxu0 0.0
        %598 = vmatprep.subr.mxu0 0.0
        %599 = vmatpush1.msra.mxu0 0.0
        %600 = vmatprep.subr.mxu0 0.0
        %601 = vmatpush1.msra.mxu0 0.0
        %602 = vmatprep.subr.mxu0 0.0
        %603 = vmatpush1.msra.mxu0 0.0
        %604 = vmatprep.subr.mxu0 0.0
        %605 = vmatpush1.msra.mxu0 0.0
        %606 = vmatprep.subr.mxu0 0.0
        %607 = vmatpush1.msra.mxu0 0.0
        %608 = vmatprep.subr.mxu0 0.0
        %609 = vmatpush1.msra.mxu0 0.0
        %610 = vmatprep.subr.mxu0 0.0
        %611 = vmatpush1.msra.mxu0 0.0
        %612 = vmatprep.subr.mxu0 0.0
        %613 = vmatpush1.msra.mxu0 0.0
        %614 = vmatprep.subr.mxu0 0.0
        %615 = vmatpush1.msra.mxu0 0.0
        %616 = vmatprep.subr.mxu0 0.0
        %617 = vmatpush1.msra.mxu0 0.0
        %618 = vmatprep.subr.mxu0 0.0
        %619 = vmatpush1.msra.mxu0 0.0
        %620 = vmatprep.subr.mxu0 0.0
        %621 = vmatpush1.msra.mxu0 0.0
        %622 = vmatprep.subr.mxu0 0.0
        %623 = vmatpush1.msra.mxu0 0.0
        %624 = vmatprep.subr.mxu0 0.0
        %625 = vmatpush1.msra.mxu0 0.0
        %626 = vmatprep.subr.mxu0 0.0
        %627 = vmatpush1.msra.mxu0 0.0
        %628 = vmatprep.subr.mxu0 0.0
        %629 = vmatpush1.msra.mxu0 0.0
        %630 = vmatprep.subr.mxu0 0.0
        %631 = vmatpush1.msra.mxu0 0.0
        %632 = vmatprep.subr.mxu0 0.0
        %633 = vmatpush1.msra.mxu0 0.0
        %634 = vmatprep.subr.mxu0 0.0
        %635 = vmatpush1.msra.mxu0 0.0
        %636 = vmatprep.subr.mxu0 0.0
        %637 = vmatpush1.msra.mxu0 0.0
        %638 = vmatprep.subr.mxu0 0.0
        %639 = vmatpush1.msra.mxu0 0.0
        %640 = vmatprep.subr.mxu0 0.0
        %641 = vmatpush1.msra.mxu0 0.0
        %642 = vmatprep.subr.mxu0 0.0
        %643 = vmatpush1.msra.mxu0 0.0
        %644 = vmatprep.subr.mxu0 0.0
        %645 = vmatpush1.msra.mxu0 0.0
        %646 = vmatprep.subr.mxu0 0.0
        %647 = vmatpush1.msra.mxu0 0.0
        %648 = vmatprep.mubr.f32.mxu0 0.0
        %649 = vmatmul.mubr.f32.gmra.mrb[0].mxu0 %v582
        %v650 = vpop.f32.mrb[0].mxu0
        %v651 = vadd.f32 0.0, %v650
        %v652 = vpop.f32.mrb[0].mxu0
        %653 = vdwg.mxu0
        %655 = vrot.lane.b32.xlu0 %v651, 8
        %v656 = vpop.permute.xlu0 %655
        %v658 = vadd.f32 %v576, %v656
        %vm659 = vcmask 130112
        %660 = vst.msk [vmem:[#allocation4] sm:$0xff] %vm659, %v658
        %661 = vst.msk [vmem:[#allocation2] sm:$0xff] %vm568, %v550
        %662 = vrot.lane.b32.xlu0 %v267, 112
        %v663 = vpop.permute.xlu0 %662
        %664 = vrot.lane.b32.xlu0 %v268, 112
        %v665 = vpop.permute.xlu0 %664
        %v666 = vsel %vm280, %v663, 0
        %v668 = vsel %vm280, %v665, 0
        %670 = vmatprep.subr.mxu0 0.0
        %671 = vmatpush1.xpose.msra.mxu0 %v668
        %672 = vmatprep.subr.mxu0 0.0
        %673 = vmatpush1.xpose.msra.mxu0 0.0
        %674 = vmatprep.subr.mxu0 0.0
        %675 = vmatpush1.xpose.msra.mxu0 0.0
        %676 = vmatprep.subr.mxu0 0.0
        %677 = vmatpush1.xpose.msra.mxu0 0.0
        %678 = vmatprep.subr.mxu0 0.0
        %679 = vmatpush1.xpose.msra.mxu0 0.0
        %680 = vmatprep.subr.mxu0 0.0
        %681 = vmatpush1.xpose.msra.mxu0 0.0
        %682 = vmatprep.subr.mxu0 0.0
        %683 = vmatpush1.xpose.msra.mxu0 0.0
        %684 = vmatprep.subr.mxu0 0.0
        %685 = vmatpush1.xpose.msra.mxu0 0.0
        %686 = vmatprep.subr.mxu0 0.0
        %687 = vmatpush1.xpose.msra.mxu0 0.0
        %688 = vmatprep.subr.mxu0 0.0
        %689 = vmatpush1.xpose.msra.mxu0 0.0
        %690 = vmatprep.subr.mxu0 0.0
        %691 = vmatpush1.xpose.msra.mxu0 0.0
        %692 = vmatprep.subr.mxu0 0.0
        %693 = vmatpush1.xpose.msra.mxu0 0.0
        %694 = vmatprep.subr.mxu0 0.0
        %695 = vmatpush1.xpose.msra.mxu0 0.0
        %696 = vmatprep.subr.mxu0 0.0
        %697 = vmatpush1.xpose.msra.mxu0 0.0
        %698 = vmatprep.subr.mxu0 0.0
        %699 = vmatpush1.xpose.msra.mxu0 0.0
        %700 = vmatprep.subr.mxu0 0.0
        %701 = vmatpush1.xpose.msra.mxu0 0.0
        %702 = vmatprep.subr.mxu0 0.0
        %703 = vmatpush1.xpose.msra.mxu0 0.0
        %704 = vmatprep.subr.mxu0 0.0
        %705 = vmatpush1.xpose.msra.mxu0 0.0
        %706 = vmatprep.subr.mxu0 0.0
        %707 = vmatpush1.xpose.msra.mxu0 0.0
        %708 = vmatprep.subr.mxu0 0.0
        %709 = vmatpush1.xpose.msra.mxu0 0.0
        %710 = vmatprep.subr.mxu0 0.0
        %711 = vmatpush1.xpose.msra.mxu0 0.0
        %712 = vmatprep.subr.mxu0 0.0
        %713 = vmatpush1.xpose.msra.mxu0 0.0
        %714 = vmatprep.subr.mxu0 0.0
        %715 = vmatpush1.xpose.msra.mxu0 0.0
        %716 = vmatprep.subr.mxu0 0.0
        %717 = vmatpush1.xpose.msra.mxu0 0.0
        %718 = vmatprep.subr.mxu0 0.0
        %719 = vmatpush1.xpose.msra.mxu0 0.0
        %720 = vmatprep.subr.mxu0 0.0
        %721 = vmatpush1.xpose.msra.mxu0 0.0
        %722 = vmatprep.subr.mxu0 0.0
        %723 = vmatpush1.xpose.msra.mxu0 0.0
        %724 = vmatprep.subr.mxu0 0.0
        %725 = vmatpush1.xpose.msra.mxu0 0.0
        %726 = vmatprep.subr.mxu0 0.0
        %727 = vmatpush1.xpose.msra.mxu0 0.0
        %728 = vmatprep.subr.mxu0 0.0
        %729 = vmatpush1.xpose.msra.mxu0 0.0
        %730 = vmatprep.subr.mxu0 0.0
        %731 = vmatpush1.xpose.msra.mxu0 0.0
        %732 = vmatprep.subr.mxu0 0.0
        %733 = vmatpush1.xpose.msra.mxu0 0.0
        %734 = vmatprep.mubr.f32.mxu0 0.0
        %735 = vmatmul.mubr.f32.gmra.mrb[0].mxu0 %v666
        %v736 = vpop.f32.mrb[0].mxu0
        %v737 = vadd.f32 0.0, %v736
        %v738 = vpop.f32.mrb[0].mxu0
        %739 = vdwg.mxu0
        %v740 = vmul.f32 %v737, 2.828427
        %v741 = vsel %vm279, -1e+30, %v740
        %v742 = vld [vmem:[#allocation2] sm:$0xff]
        %v743 = vsel %vm280, %v741, -inf
        %744 = vmax.xlane.f32.xlu0 %v743
        %v745 = vpop.xlane.xlu0 %744
        %v746 = vmax.f32 %v742, %v745
        %v747 = vsub.f32 %v742, %v746
        %v748 = vmul.f32 %v747, 1.442695
        %v749 = vpow.pop %v748
        %751 = vset.pattern.permute.xlu0 2
        %752 = vperm.xlu0 %751, %v746
        %v753 = vpop.permute.xlu0 %752
        %v755 = vsub.f32 %v741, %v753
        %v756 = vmul.f32 %v755, 1.442695
        %v757 = vpow.pop %v756
        %v758 = vld [vmem:[#allocation3] sm:$0xff]
        %v759 = vmul.f32 %v749, %v758
        %v760 = vsel %vm280, %v757, 0.0
        %761 = vadd.xlane.f32.xlu0 %v760
        %v762 = vpop.xlane.xlu0 %761
        %v763 = vadd.f32 %v759, %v762
        %vm764 = vcmask 23568
        %765 = vst.msk [vmem:[#allocation3] sm:$0xff] %vm764, %v763
        %v766 = vld [vmem:[#allocation4] sm:$0xff]
        %768 = vset.pattern.permute.xlu0 2
        %769 = vperm.xlu0 %768, %v749
        %v770 = vpop.permute.xlu0 %769
        %v772 = vmul.f32 %v770, %v766
        %773 = vrot.lane.b32.xlu0 %v269, 112
        %v774 = vpop.permute.xlu0 %773
        %v777 = vsel %vm280, %v757, 0
        %779 = vmatprep.subr.mxu0 0.0
        %780 = vmatpush1.msra.mxu0 %v774
        %781 = vmatprep.subr.mxu0 0.0
        %782 = vmatpush1.msra.mxu0 0.0
        %783 = vmatprep.subr.mxu0 0.0
        %784 = vmatpush1.msra.mxu0 0.0
        %785 = vmatprep.subr.mxu0 0.0
        %786 = vmatpush1.msra.mxu0 0.0
        %787 = vmatprep.subr.mxu0 0.0
        %788 = vmatpush1.msra.mxu0 0.0
        %789 = vmatprep.subr.mxu0 0.0
        %790 = vmatpush1.msra.mxu0 0.0
        %791 = vmatprep.subr.mxu0 0.0
        %792 = vmatpush1.msra.mxu0 0.0
        %793 = vmatprep.subr.mxu0 0.0
        %794 = vmatpush1.msra.mxu0 0.0
        %795 = vmatprep.subr.mxu0 0.0
        %796 = vmatpush1.msra.mxu0 0.0
        %797 = vmatprep.subr.mxu0 0.0
        %798 = vmatpush1.msra.mxu0 0.0
        %799 = vmatprep.subr.mxu0 0.0
        %800 = vmatpush1.msra.mxu0 0.0
        %801 = vmatprep.subr.mxu0 0.0
        %802 = vmatpush1.msra.mxu0 0.0
        %803 = vmatprep.subr.mxu0 0.0
        %804 = vmatpush1.msra.mxu0 0.0
        %805 = vmatprep.subr.mxu0 0.0
        %806 = vmatpush1.msra.mxu0 0.0
        %807 = vmatprep.subr.mxu0 0.0
        %808 = vmatpush1.msra.mxu0 0.0
        %809 = vmatprep.subr.mxu0 0.0
        %810 = vmatpush1.msra.mxu0 0.0
        %811 = vmatprep.subr.mxu0 0.0
        %812 = vmatpush1.msra.mxu0 0.0
        %813 = vmatprep.subr.mxu0 0.0
        %814 = vmatpush1.msra.mxu0 0.0
        %815 = vmatprep.subr.mxu0 0.0
        %816 = vmatpush1.msra.mxu0 0.0
        %817 = vmatprep.subr.mxu0 0.0
        %818 = vmatpush1.msra.mxu0 0.0
        %819 = vmatprep.subr.mxu0 0.0
        %820 = vmatpush1.msra.mxu0 0.0
        %821 = vmatprep.subr.mxu0 0.0
        %822 = vmatpush1.msra.mxu0 0.0
        %823 = vmatprep.subr.mxu0 0.0
        %824 = vmatpush1.msra.mxu0 0.0
        %825 = vmatprep.subr.mxu0 0.0
        %826 = vmatpush1.msra.mxu0 0.0
        %827 = vmatprep.subr.mxu0 0.0
        %828 = vmatpush1.msra.mxu0 0.0
        %829 = vmatprep.subr.mxu0 0.0
        %830 = vmatpush1.msra.mxu0 0.0
        %831 = vmatprep.subr.mxu0 0.0
        %832 = vmatpush1.msra.mxu0 0.0
        %833 = vmatprep.subr.mxu0 0.0
        %834 = vmatpush1.msra.mxu0 0.0
        %835 = vmatprep.subr.mxu0 0.0
        %836 = vmatpush1.msra.mxu0 0.0
        %837 = vmatprep.subr.mxu0 0.0
        %838 = vmatpush1.msra.mxu0 0.0
        %839 = vmatprep.subr.mxu0 0.0
        %840 = vmatpush1.msra.mxu0 0.0
        %841 = vmatprep.subr.mxu0 0.0
        %842 = vmatpush1.msra.mxu0 0.0
        %843 = vmatprep.mubr.f32.mxu0 0.0
        %844 = vmatmul.mubr.f32.gmra.mrb[0].mxu0 %v777
        %v845 = vpop.f32.mrb[0].mxu0
        %v846 = vadd.f32 0.0, %v845
        %v847 = vpop.f32.mrb[0].mxu0
        %848 = vdwg.mxu0
        %850 = vrot.lane.b32.xlu0 %v846, 16
        %v851 = vpop.permute.xlu0 %850
        %v853 = vadd.f32 %v772, %v851
        %vm854 = vcmask 195712
        %855 = vst.msk [vmem:[#allocation4] sm:$0xff] %vm854, %v853
        %856 = vst.msk [vmem:[#allocation2] sm:$0xff] %vm764, %v746
        %857 = vrot.lane.b32.xlu0 %v267, 104
        %v858 = vpop.permute.xlu0 %857
        %859 = vrot.lane.b32.xlu0 %v268, 104
        %v860 = vpop.permute.xlu0 %859
        %v861 = vsel %vm280, %v858, 0
        %v863 = vsel %vm280, %v860, 0
        %865 = vmatprep.subr.mxu0 0.0
        %866 = vmatpush1.xpose.msra.mxu0 %v863
        %867 = vmatprep.subr.mxu0 0.0
        %868 = vmatpush1.xpose.msra.mxu0 0.0
        %869 = vmatprep.subr.mxu0 0.0
        %870 = vmatpush1.xpose.msra.mxu0 0.0
        %871 = vmatprep.subr.mxu0 0.0
        %872 = vmatpush1.xpose.msra.mxu0 0.0
        %873 = vmatprep.subr.mxu0 0.0
        %874 = vmatpush1.xpose.msra.mxu0 0.0
        %875 = vmatprep.subr.mxu0 0.0
        %876 = vmatpush1.xpose.msra.mxu0 0.0
        %877 = vmatprep.subr.mxu0 0.0
        %878 = vmatpush1.xpose.msra.mxu0 0.0
        %879 = vmatprep.subr.mxu0 0.0
        %880 = vmatpush1.xpose.msra.mxu0 0.0
        %881 = vmatprep.subr.mxu0 0.0
        %882 = vmatpush1.xpose.msra.mxu0 0.0
        %883 = vmatprep.subr.mxu0 0.0
        %884 = vmatpush1.xpose.msra.mxu0 0.0
        %885 = vmatprep.subr.mxu0 0.0
        %886 = vmatpush1.xpose.msra.mxu0 0.0
        %887 = vmatprep.subr.mxu0 0.0
        %888 = vmatpush1.xpose.msra.mxu0 0.0
        %889 = vmatprep.subr.mxu0 0.0
        %890 = vmatpush1.xpose.msra.mxu0 0.0
        %891 = vmatprep.subr.mxu0 0.0
        %892 = vmatpush1.xpose.msra.mxu0 0.0
        %893 = vmatprep.subr.mxu0 0.0
        %894 = vmatpush1.xpose.msra.mxu0 0.0
        %895 = vmatprep.subr.mxu0 0.0
        %896 = vmatpush1.xpose.msra.mxu0 0.0
        %897 = vmatprep.subr.mxu0 0.0
        %898 = vmatpush1.xpose.msra.mxu0 0.0
        %899 = vmatprep.subr.mxu0 0.0
        %900 = vmatpush1.xpose.msra.mxu0 0.0
        %901 = vmatprep.subr.mxu0 0.0
        %902 = vmatpush1.xpose.msra.mxu0 0.0
        %903 = vmatprep.subr.mxu0 0.0
        %904 = vmatpush1.xpose.msra.mxu0 0.0
        %905 = vmatprep.subr.mxu0 0.0
        %906 = vmatpush1.xpose.msra.mxu0 0.0
        %907 = vmatprep.subr.mxu0 0.0
        %908 = vmatpush1.xpose.msra.mxu0 0.0
        %909 = vmatprep.subr.mxu0 0.0
        %910 = vmatpush1.xpose.msra.mxu0 0.0
        %911 = vmatprep.subr.mxu0 0.0
        %912 = vmatpush1.xpose.msra.mxu0 0.0
        %913 = vmatprep.subr.mxu0 0.0
        %914 = vmatpush1.xpose.msra.mxu0 0.0
        %915 = vmatprep.subr.mxu0 0.0
        %916 = vmatpush1.xpose.msra.mxu0 0.0
        %917 = vmatprep.subr.mxu0 0.0
        %918 = vmatpush1.xpose.msra.mxu0 0.0
        %919 = vmatprep.subr.mxu0 0.0
        %920 = vmatpush1.xpose.msra.mxu0 0.0
        %921 = vmatprep.subr.mxu0 0.0
        %922 = vmatpush1.xpose.msra.mxu0 0.0
        %923 = vmatprep.subr.mxu0 0.0
        %924 = vmatpush1.xpose.msra.mxu0 0.0
        %925 = vmatprep.subr.mxu0 0.0
        %926 = vmatpush1.xpose.msra.mxu0 0.0
        %927 = vmatprep.subr.mxu0 0.0
        %928 = vmatpush1.xpose.msra.mxu0 0.0
        %929 = vmatprep.mubr.f32.mxu0 0.0
        %930 = vmatmul.mubr.f32.gmra.mrb[0].mxu0 %v861
        %v931 = vpop.f32.mrb[0].mxu0
        %v932 = vadd.f32 0.0, %v931
        %v933 = vpop.f32.mrb[0].mxu0
        %934 = vdwg.mxu0
        %v935 = vmul.f32 %v932, 2.828427
        %v936 = vsel %vm279, -1e+30, %v935
        %v937 = vld [vmem:[#allocation2] sm:$0xff]
        %v938 = vsel %vm280, %v936, -inf
        %939 = vmax.xlane.f32.xlu0 %v938
        %v940 = vpop.xlane.xlu0 %939
        %v941 = vmax.f32 %v937, %v940
        %v942 = vsub.f32 %v937, %v941
        %v943 = vmul.f32 %v942, 1.442695
        %v944 = vpow.pop %v943
        %946 = vset.pattern.permute.xlu0 3
        %947 = vperm.xlu0 %946, %v941
        %v948 = vpop.permute.xlu0 %947
        %v950 = vsub.f32 %v936, %v948
        %v951 = vmul.f32 %v950, 1.442695
        %v952 = vpow.pop %v951
        %v953 = vld [vmem:[#allocation3] sm:$0xff]
        %v954 = vmul.f32 %v944, %v953
        %v955 = vsel %vm280, %v952, 0.0
        %956 = vadd.xlane.f32.xlu0 %v955
        %v957 = vpop.xlane.xlu0 %956
        %v958 = vadd.f32 %v954, %v957
        %vm959 = vcmask 31768
        %960 = vst.msk [vmem:[#allocation3] sm:$0xff] %vm959, %v958
        %v961 = vld [vmem:[#allocation4] sm:$0xff]
        %963 = vset.pattern.permute.xlu0 3
        %964 = vperm.xlu0 %963, %v944
        %v965 = vpop.permute.xlu0 %964
        %v967 = vmul.f32 %v965, %v961
        %968 = vrot.lane.b32.xlu0 %v269, 104
        %v969 = vpop.permute.xlu0 %968
        %v972 = vsel %vm280, %v952, 0
        %974 = vmatprep.subr.mxu0 0.0
        %975 = vmatpush1.msra.mxu0 %v969
        %976 = vmatprep.subr.mxu0 0.0
        %977 = vmatpush1.msra.mxu0 0.0
        %978 = vmatprep.subr.mxu0 0.0
        %979 = vmatpush1.msra.mxu0 0.0
        %980 = vmatprep.subr.mxu0 0.0
        %981 = vmatpush1.msra.mxu0 0.0
        %982 = vmatprep.subr.mxu0 0.0
        %983 = vmatpush1.msra.mxu0 0.0
        %984 = vmatprep.subr.mxu0 0.0
        %985 = vmatpush1.msra.mxu0 0.0
        %986 = vmatprep.subr.mxu0 0.0
        %987 = vmatpush1.msra.mxu0 0.0
        %988 = vmatprep.subr.mxu0 0.0
        %989 = vmatpush1.msra.mxu0 0.0
        %990 = vmatprep.subr.mxu0 0.0
        %991 = vmatpush1.msra.mxu0 0.0
        %992 = vmatprep.subr.mxu0 0.0
        %993 = vmatpush1.msra.mxu0 0.0
        %994 = vmatprep.subr.mxu0 0.0
        %995 = vmatpush1.msra.mxu0 0.0
        %996 = vmatprep.subr.mxu0 0.0
        %997 = vmatpush1.msra.mxu0 0.0
        %998 = vmatprep.subr.mxu0 0.0
        %999 = vmatpush1.msra.mxu0 0.0
        %1000 = vmatprep.subr.mxu0 0.0
        %1001 = vmatpush1.msra.mxu0 0.0
        %1002 = vmatprep.subr.mxu0 0.0
        %1003 = vmatpush1.msra.mxu0 0.0
        %1004 = vmatprep.subr.mxu0 0.0
        %1005 = vmatpush1.msra.mxu0 0.0
        %1006 = vmatprep.subr.mxu0 0.0
        %1007 = vmatpush1.msra.mxu0 0.0
        %1008 = vmatprep.subr.mxu0 0.0
        %1009 = vmatpush1.msra.mxu0 0.0
        %1010 = vmatprep.subr.mxu0 0.0
        %1011 = vmatpush1.msra.mxu0 0.0
        %1012 = vmatprep.subr.mxu0 0.0
        %1013 = vmatpush1.msra.mxu0 0.0
        %1014 = vmatprep.subr.mxu0 0.0
        %1015 = vmatpush1.msra.mxu0 0.0
        %1016 = vmatprep.subr.mxu0 0.0
        %1017 = vmatpush1.msra.mxu0 0.0
        %1018 = vmatprep.subr.mxu0 0.0
        %1019 = vmatpush1.msra.mxu0 0.0
        %1020 = vmatprep.subr.mxu0 0.0
        %1021 = vmatpush1.msra.mxu0 0.0
        %1022 = vmatprep.subr.mxu0 0.0
        %1023 = vmatpush1.msra.mxu0 0.0
        %1024 = vmatprep.subr.mxu0 0.0
        %1025 = vmatpush1.msra.mxu0 0.0
        %1026 = vmatprep.subr.mxu0 0.0
        %1027 = vmatpush1.msra.mxu0 0.0
        %1028 = vmatprep.subr.mxu0 0.0
        %1029 = vmatpush1.msra.mxu0 0.0
        %1030 = vmatprep.subr.mxu0 0.0
        %1031 = vmatpush1.msra.mxu0 0.0
        %1032 = vmatprep.subr.mxu0 0.0
        %1033 = vmatpush1.msra.mxu0 0.0
        %1034 = vmatprep.subr.mxu0 0.0
        %1035 = vmatpush1.msra.mxu0 0.0
        %1036 = vmatprep.subr.mxu0 0.0
        %1037 = vmatpush1.msra.mxu0 0.0
        %1038 = vmatprep.mubr.f32.mxu0 0.0
        %1039 = vmatmul.mubr.f32.gmra.mrb[0].mxu0 %v972
        %v1040 = vpop.f32.mrb[0].mxu0
        %v1041 = vadd.f32 0.0, %v1040
        %v1042 = vpop.f32.mrb[0].mxu0
        %1043 = vdwg.mxu0
        %1045 = vrot.lane.b32.xlu0 %v1041, 24
        %v1046 = vpop.permute.xlu0 %1045
        %v1048 = vadd.f32 %v967, %v1046
        %vm1049 = vcmask 261312
        %1050 = vst.msk [vmem:[#allocation4] sm:$0xff] %vm1049, %v1048
        %1051 = vst.msk [vmem:[#allocation2] sm:$0xff] %vm959, %v941
      $region40: #{mha_combined_qkv.4} parent=31 // pred_fallthru
        _
      // Predicated region
      $region41: #{mha_combined_qkv.4} parent=31 // pred_check
        %p1052 = pneg %p251
      $region42: #{mha_combined_qkv.4} parent=31 // pred_check_branch
        %1054 = sbr.rel (%p1052) target = $region44
      $region43: #{mha_combined_qkv.4} parent=31 // pred_region
        %v1055 = vld [vmem:[#allocation3] sm:$0xff]
        %v1056 = vrcp.pop %v1055
        %v1057 = vld [vmem:[#allocation4] sm:$0xff]
        %1059 = vset.pattern.permute.xlu0 0
        %1060 = vperm.xlu0 %1059, %v1056
        %v1061 = vpop.permute.xlu0 %1060
        %v1063 = vmul.f32 %v1057, %v1061
        %1064 = vset.pattern.permute.xlu0 1
        %1065 = vperm.xlu0 %1064, %v1056
        %v1066 = vpop.permute.xlu0 %1065
        %v1068 = vmul.f32 %v1057, %v1066
        %1069 = vset.pattern.permute.xlu0 2
        %1070 = vperm.xlu0 %1069, %v1056
        %v1071 = vpop.permute.xlu0 %1070
        %v1073 = vmul.f32 %v1057, %v1071
        %1074 = vset.pattern.permute.xlu0 3
        %1075 = vperm.xlu0 %1074, %v1056
        %v1076 = vpop.permute.xlu0 %1075
        %v1078 = vmul.f32 %v1057, %v1076
        %vm1079 = vcmask 64512
        %v1080 = vsel %vm1079, %v1063, %v1068
        %vm1081 = vcmask 130048
        %v1082 = vsel %vm1081, %v1080, %v1073
        %vm1083 = vcmask 195584
        %v1084 = vsel %vm1083, %v1082, %v1078
        %vm1085 = vcmask 261120
        %1086 = vst.msk [vmem:[%s249] sm:$0xff] %vm1085, %v1084
      $region44: #{mha_combined_qkv.4} parent=31 // pred_fallthru
        _
      %s1087 = sadd.s32 %s19, %s20
      %p1088 = scmp.lt.s32.totalorder %s1087, 1
      %s1089 = scalar_select %p1088, %s1087, 1
      %s1090 = smul.addr %s1089, 8
      %s1091 = scalar_lea.vmem %s3, %s1090
      // Predicated region
      $region45: #{mha_combined_qkv.4} parent=31 // pred_check
        %p1092 = pneg %p137
      $region46: #{mha_combined_qkv.4} parent=31 // pred_check_branch
        %1094 = sbr.rel (%p1092) target = $region48
      $region47: #{mha_combined_qkv.4} parent=31 // pred_region
        %s1095 = sadd.s32 %s19, %s20
      $region48: #{mha_combined_qkv.4} parent=31 // pred_fallthru
        _
    $region32: #{mha_combined_qkv.4} parent=5 // pred_fallthru
      _
    %p1096 = scmp.le.s32.totalorder 2, %s9
    // Predicated region
    $region49: #{mha_combined_qkv.4} parent=5 // pred_check
      %p1097 = pneg %p1096
    $region50: #{mha_combined_qkv.4} parent=5 // pred_check_branch
      %1099 = sbr.rel (%p1097) target = $region52
    $region51: #{mha_combined_qkv.4} parent=5 // pred_region
      %s1100 = ssub.s32 %s9, 2
      // Predicated region
      $region53: #{mha_combined_qkv.4} parent=51 // pred_check
        %p1101 = pneg %p143
      $region54: #{mha_combined_qkv.4} parent=51 // pred_check_branch
        %1103 = sbr.rel (%p1101) target = $region56
      $region55: #{mha_combined_qkv.4} parent=51 // pred_region
        %s1104 = sadd.s32 %s22, %s23
        %p1105 = scmp.lt.s32.totalorder %s1104, 1
        %s1106 = scalar_select %p1105, %s1104, 1
        %s1107 = smul.addr %s1106, 8
        %s1108 = scalar_lea.vmem %s3, %s1107
      $region56: #{mha_combined_qkv.4} parent=51 // pred_fallthru
        _
    $region52: #{mha_combined_qkv.4} parent=5 // pred_fallthru
      _
  $region6: #{mha_combined_qkv.4} parent=0 // loop_footer
    %s13 = sadd.s32 1, %s9
  $region7: #{mha_combined_qkv.4} parent=0 // loop_footer_branch
    %8 = sbr.rel target = $region3
  $region8: #{mha_combined_qkv.4} parent=0 // loop_exit
    _

</llo_original>
